<compile_context>
chip_gen: v7x
topology: tpu7x:2x2x1
jax: 0.10.0
libtpu: 0.0.40
codegen_flags: <defaults>
</compile_context>

<pallas_src>
import functools

import numpy as np
import jax
import jax.numpy as jnp
from jax.experimental import pallas as pl
from jax.experimental.pallas import tpu as pltpu

# ----------------------------- model constants ------------------------------
MAX_VERTS_PER_REGION = 40          # self.max_verts_per_region
SQUARED_DIST = False               # squared_dist=False
REGION_AGG = "sum"                 # region_aggregation_type='sum'
R2R_DIST = "min"                   # r2r_dist_type='min'


# ------------------------------- Pallas kernel ------------------------------
def _contact_kernel(x_rows_ref, y_rows_ref, x_cols_ref, y_cols_ref,
                    w1_ref, w2_ref, o_ref, *, R, M, factor, squared):
    """Grid = (B,). One grid step handles one batch element (all R*R pairs).

    x_rows_ref : VMEM f32 (1, R, M, 3)   v1 sampled verts, per-region row blocks
    y_rows_ref : VMEM f32 (1, R, M, 3)   v2 sampled verts, per-region row blocks
    x_cols_ref : VMEM f32 (1, 3, R*M)    v1 sampled verts, lane-dense columns
    y_cols_ref : VMEM f32 (1, 3, R*M)    v2 sampled verts, lane-dense columns
    w1_ref     : VMEM f32 (1, R, 1, R*M) w1[r1, n] = (cmap[r1, n // M] != 0)
    w2_ref     : VMEM f32 (1, R, 1, R*M) w2[r2, n] = (cmap[n // M, r2] != 0)
    o_ref      : VMEM f32 (1, 1, 1)      per-batch loss
    """
    N = R * M
    xc = x_cols_ref[0]                  # (3, N)  all v1 sampled points, lane-dense
    yc = y_cols_ref[0]                  # (3, N)  all v2 sampled points, lane-dense

    acc = jnp.zeros((1, N), jnp.float32)
    # R is small and static -> fully unrolled straight-line loop (static indices).
    for r in range(R):
        xb = x_rows_ref[0, r]           # (M, 3)  region r of v1
        yb = y_rows_ref[0, r]           # (M, 3)  region r of v2
        wa = w1_ref[0, r]               # (1, N)  cmap[r, :] repeated M times
        wb = w2_ref[0, r]               # (1, N)  cmap[:, r] repeated M times

        # Squared distances: v1 region-r points (sublanes) vs ALL v2 points (lanes).
        d2a = ((xb[:, 0:1] - yc[0:1, :]) ** 2
               + (xb[:, 1:2] - yc[1:2, :]) ** 2
               + (xb[:, 2:3] - yc[2:3, :]) ** 2)          # (M, N), pure VPU
        # Squared distances: v2 region-r points (sublanes) vs ALL v1 points (lanes).
        d2b = ((yb[:, 0:1] - xc[0:1, :]) ** 2
               + (yb[:, 1:2] - xc[1:2, :]) ** 2
               + (yb[:, 2:3] - xc[2:3, :]) ** 2)          # (M, N)

        # r2r_dist_type == 'min' : min over this region's points (sublane reduce).
        amin = jnp.min(d2a, axis=0, keepdims=True)        # (1, N)
        bmin = jnp.min(d2b, axis=0, keepdims=True)        # (1, N)
        if squared:
            # squared_dist=True path: (factor * min(d2))^2
            amin = amin * amin
            bmin = bmin * bmin
        # squared_dist=False path: (factor * min(sqrt(d2)))^2 == factor^2 * min(d2),
        # so no sqrt is needed.
        acc = acc + amin * wa + bmin * wb

    scale = (factor * factor) / M       # factor^2 and the mean's 1/M, hoisted
    total = scale * jnp.sum(acc)
    o_ref[...] = jnp.zeros_like(o_ref) + total            # broadcast scalar store


# --------------------------------- wrapper ----------------------------------
def contact_map_loss(v1, v2, cmap, rid_to_vid_list, factor=1.0,
                     squared=SQUARED_DIST):
    """v1, v2: (B, V, 3); cmap: (B, R, R) or (R, R); rid_to_vid_list: (R, M) int.

    Returns loss of shape (B,) float32.
    """
    if cmap.ndim == 2:                   # cmap.unsqueeze(0) in the torch code
        cmap = cmap[None]
    B = v1.shape[0]
    R, M = rid_to_vid_list.shape
    N = R * M

    # Glue: deterministic gather of the down-sampled region vertices + layout prep.
    v1r = v1[:, rid_to_vid_list, :].astype(jnp.float32)      # (B, R, M, 3)
    v2r = v2[:, rid_to_vid_list, :].astype(jnp.float32)      # (B, R, M, 3)
    x_cols = jnp.transpose(v1r.reshape(B, N, 3), (0, 2, 1))  # (B, 3, N) lane-dense
    y_cols = jnp.transpose(v2r.reshape(B, N, 3), (0, 2, 1))  # (B, 3, N) lane-dense

    # torch.where(cmap): only region pairs with nonzero cmap contribute.
    mask = (cmap != 0).astype(jnp.float32)                   # (B, R, R)
    w1 = jnp.repeat(mask, M, axis=2)[:, :, None, :]                      # (B,R,1,N)
    w2 = jnp.repeat(jnp.swapaxes(mask, 1, 2), M, axis=2)[:, :, None, :]  # (B,R,1,N)

    kernel = functools.partial(_contact_kernel, R=R, M=M,
                               factor=float(factor), squared=bool(squared))

    out = pl.pallas_call(
        kernel,
        out_shape=jax.ShapeDtypeStruct((B, 1, 1), jnp.float32),
        grid_spec=pltpu.PrefetchScalarGridSpec(
            num_scalar_prefetch=0,
            grid=(B,),
            in_specs=[
                pl.BlockSpec((1, R, M, 3), lambda b: (b, 0, 0, 0)),   # v1 row blocks
                pl.BlockSpec((1, R, M, 3), lambda b: (b, 0, 0, 0)),   # v2 row blocks
                pl.BlockSpec((1, 3, N), lambda b: (b, 0, 0)),         # v1 columns
                pl.BlockSpec((1, 3, N), lambda b: (b, 0, 0)),         # v2 columns
                pl.BlockSpec((1, R, 1, N), lambda b: (b, 0, 0, 0)),   # w1 weights
                pl.BlockSpec((1, R, 1, N), lambda b: (b, 0, 0, 0)),   # w2 weights
            ],
            out_specs=pl.BlockSpec((1, 1, 1), lambda b: (b, 0, 0)),
        ),
        compiler_params=pltpu.CompilerParams(
            # Batch axis is independent -> parallel (lets v7x shard over 2 TCs).
            dimension_semantics=("parallel",)),
    )(v1r, v2r, x_cols, y_cols, w1, w2)

    return out[:, 0, 0]


# ---------------------------- pure-JAX reference ----------------------------
def contact_map_loss_ref(v1, v2, cmap, rid, factor=1.0, squared=SQUARED_DIST):
    if cmap.ndim == 2:
        cmap = cmap[None]
    v1r = v1[:, rid, :]                                  # (B, R, M, 3)
    v2r = v2[:, rid, :]
    xx = jnp.sum(v1r ** 2, -1)[:, :, None, :, None]      # (B,R,1,M,1)
    yy = jnp.sum(v2r ** 2, -1)[:, None, :, None, :]      # (B,1,R,1,M)
    cross = jnp.einsum('bimd,bjnd->bijmn', v1r, v2r)
    d2 = jnp.maximum(xx + yy - 2.0 * cross, 0.0)
    d = d2 if squared else jnp.sqrt(d2)                  # pcl_pcl_pairwise_distance
    a = jnp.min(d, axis=3)                               # (B,R,R,M) min over v1 pts
    b = jnp.min(d, axis=4)                               # (B,R,R,M) min over v2 pts
    pair = jnp.mean((factor * a) ** 2, -1) + jnp.mean((factor * b) ** 2, -1)
    m = (cmap != 0).astype(jnp.float32)
    return jnp.sum(pair * m, axis=(1, 2))


# ------------------------------------ main -----------------------------------
if __name__ == "__main__":
    B, V, R, M = 2, 64, 6, MAX_VERTS_PER_REGION

    # Deterministic synthetic region->vertex downsampling table (the module
    # builds this from a pickle; here it is generated in-script).
    rid_to_vid_list = np.stack(
        [np.random.RandomState(r).choice(V, M, replace=False) for r in range(R)]
    ).astype(np.int32)
    rid_to_vid_list = jnp.asarray(rid_to_vid_list)

    key = jax.random.PRNGKey(0)
    k1, k2, k3 = jax.random.split(key, 3)
    v1 = jax.random.normal(k1, (B, V, 3), dtype=jnp.float32)
    v2 = jax.random.normal(k2, (B, V, 3), dtype=jnp.float32)
    cmap = (jax.random.uniform(k3, (B, R, R)) > 0.5).astype(jnp.float32)

    loss = contact_map_loss(v1, v2, cmap, rid_to_vid_list, factor=1.0)
    loss = jax.block_until_ready(loss)

    ref = contact_map_loss_ref(v1, v2, cmap, rid_to_vid_list, factor=1.0)
    np.testing.assert_allclose(np.asarray(loss), np.asarray(ref),
                               rtol=1e-4, atol=1e-4)
    print("KERNEL_OK")
</pallas_src>

<mosaic_0001>
module attributes {stable_mosaic.version = 11 : i64} {
  func.func @_contact_kernel(%arg0: i32, %arg1: memref<1x6x40x3xf32, #tpu.memory_space<vmem>>, %arg2: memref<1x6x40x3xf32, #tpu.memory_space<vmem>>, %arg3: memref<1x3x240xf32, #tpu.memory_space<vmem>>, %arg4: memref<1x3x240xf32, #tpu.memory_space<vmem>>, %arg5: memref<1x6x1x240xf32, #tpu.memory_space<vmem>>, %arg6: memref<1x6x1x240xf32, #tpu.memory_space<vmem>>, %arg7: memref<1x1x1xf32, #tpu.memory_space<vmem>>) attributes {dimension_semantics = [#tpu.dimension_semantics<parallel>], iteration_bounds = array<i64: 2>, scalar_prefetch = 0 : i64, scratch_operands = 0 : i64, tpu.core_type = #tpu.core_type<tc>, window_params = [{transform_indices = @transform_0, window_bounds = array<i64: 1, 6, 40, 3>}, {transform_indices = @transform_1, window_bounds = array<i64: 1, 6, 40, 3>}, {transform_indices = @transform_2, window_bounds = array<i64: 1, 3, 240>}, {transform_indices = @transform_3, window_bounds = array<i64: 1, 3, 240>}, {transform_indices = @transform_4, window_bounds = array<i64: 1, 6, 1, 240>}, {transform_indices = @transform_5, window_bounds = array<i64: 1, 6, 1, 240>}, {transform_indices = @transform_6, window_bounds = array<i64: 1, 1, 1>}]} {
    %c0 = arith.constant 0 : index
    %c0_0 = arith.constant 0 : index
    %c0_1 = arith.constant 0 : index
    %0 = vector.load %arg3[%c0, %c0_0, %c0_1] : memref<1x3x240xf32, #tpu.memory_space<vmem>>, vector<1x3x240xf32>
    %1 = vector.shape_cast %0 : vector<1x3x240xf32> to vector<3x240xf32>
    %c0_2 = arith.constant 0 : index
    %c0_3 = arith.constant 0 : index
    %c0_4 = arith.constant 0 : index
    %2 = vector.load %arg4[%c0_2, %c0_3, %c0_4] : memref<1x3x240xf32, #tpu.memory_space<vmem>>, vector<1x3x240xf32>
    %3 = vector.shape_cast %2 : vector<1x3x240xf32> to vector<3x240xf32>
    %cst = arith.constant 0.000000e+00 : f32
    %4 = vector.broadcast %cst : f32 to vector<1x240xf32>
    %c0_5 = arith.constant 0 : index
    %c0_6 = arith.constant 0 : index
    %c0_7 = arith.constant 0 : index
    %c0_8 = arith.constant 0 : index
    %5 = vector.load %arg1[%c0_5, %c0_6, %c0_7, %c0_8] : memref<1x6x40x3xf32, #tpu.memory_space<vmem>>, vector<1x1x40x3xf32>
    %6 = vector.shape_cast %5 : vector<1x1x40x3xf32> to vector<40x3xf32>
    %c0_9 = arith.constant 0 : index
    %c0_10 = arith.constant 0 : index
    %c0_11 = arith.constant 0 : index
    %c0_12 = arith.constant 0 : index
    %7 = vector.load %arg2[%c0_9, %c0_10, %c0_11, %c0_12] : memref<1x6x40x3xf32, #tpu.memory_space<vmem>>, vector<1x1x40x3xf32>
    %8 = vector.shape_cast %7 : vector<1x1x40x3xf32> to vector<40x3xf32>
    %c0_13 = arith.constant 0 : index
    %c0_14 = arith.constant 0 : index
    %c0_15 = arith.constant 0 : index
    %c0_16 = arith.constant 0 : index
    %9 = vector.load %arg5[%c0_13, %c0_14, %c0_15, %c0_16] : memref<1x6x1x240xf32, #tpu.memory_space<vmem>>, vector<1x1x1x240xf32>
    %10 = vector.shape_cast %9 : vector<1x1x1x240xf32> to vector<1x240xf32>
    %c0_17 = arith.constant 0 : index
    %c0_18 = arith.constant 0 : index
    %c0_19 = arith.constant 0 : index
    %c0_20 = arith.constant 0 : index
    %11 = vector.load %arg6[%c0_17, %c0_18, %c0_19, %c0_20] : memref<1x6x1x240xf32, #tpu.memory_space<vmem>>, vector<1x1x1x240xf32>
    %12 = vector.shape_cast %11 : vector<1x1x1x240xf32> to vector<1x240xf32>
    %13 = vector.extract_strided_slice %6 {offsets = [0, 0], sizes = [40, 1], strides = [1, 1]} : vector<40x3xf32> to vector<40x1xf32>
    %14 = vector.extract_strided_slice %3 {offsets = [0, 0], sizes = [1, 240], strides = [1, 1]} : vector<3x240xf32> to vector<1x240xf32>
    %15 = vector.broadcast %13 : vector<40x1xf32> to vector<40x240xf32>
    %16 = vector.broadcast %14 : vector<1x240xf32> to vector<40x240xf32>
    %17 = arith.subf %15, %16 : vector<40x240xf32>
    %18 = arith.mulf %17, %17 : vector<40x240xf32>
    %19 = vector.extract_strided_slice %6 {offsets = [0, 1], sizes = [40, 1], strides = [1, 1]} : vector<40x3xf32> to vector<40x1xf32>
    %20 = vector.extract_strided_slice %3 {offsets = [1, 0], sizes = [1, 240], strides = [1, 1]} : vector<3x240xf32> to vector<1x240xf32>
    %21 = vector.broadcast %19 : vector<40x1xf32> to vector<40x240xf32>
    %22 = vector.broadcast %20 : vector<1x240xf32> to vector<40x240xf32>
    %23 = arith.subf %21, %22 : vector<40x240xf32>
    %24 = arith.mulf %23, %23 : vector<40x240xf32>
    %25 = arith.addf %18, %24 : vector<40x240xf32>
    %26 = vector.extract_strided_slice %6 {offsets = [0, 2], sizes = [40, 1], strides = [1, 1]} : vector<40x3xf32> to vector<40x1xf32>
    %27 = vector.extract_strided_slice %3 {offsets = [2, 0], sizes = [1, 240], strides = [1, 1]} : vector<3x240xf32> to vector<1x240xf32>
    %28 = vector.broadcast %26 : vector<40x1xf32> to vector<40x240xf32>
    %29 = vector.broadcast %27 : vector<1x240xf32> to vector<40x240xf32>
    %30 = arith.subf %28, %29 : vector<40x240xf32>
    %31 = arith.mulf %30, %30 : vector<40x240xf32>
    %32 = arith.addf %25, %31 : vector<40x240xf32>
    %33 = vector.extract_strided_slice %8 {offsets = [0, 0], sizes = [40, 1], strides = [1, 1]} : vector<40x3xf32> to vector<40x1xf32>
    %34 = vector.extract_strided_slice %1 {offsets = [0, 0], sizes = [1, 240], strides = [1, 1]} : vector<3x240xf32> to vector<1x240xf32>
    %35 = vector.broadcast %33 : vector<40x1xf32> to vector<40x240xf32>
    %36 = vector.broadcast %34 : vector<1x240xf32> to vector<40x240xf32>
    %37 = arith.subf %35, %36 : vector<40x240xf32>
    %38 = arith.mulf %37, %37 : vector<40x240xf32>
    %39 = vector.extract_strided_slice %8 {offsets = [0, 1], sizes = [40, 1], strides = [1, 1]} : vector<40x3xf32> to vector<40x1xf32>
    %40 = vector.extract_strided_slice %1 {offsets = [1, 0], sizes = [1, 240], strides = [1, 1]} : vector<3x240xf32> to vector<1x240xf32>
    %41 = vector.broadcast %39 : vector<40x1xf32> to vector<40x240xf32>
    %42 = vector.broadcast %40 : vector<1x240xf32> to vector<40x240xf32>
    %43 = arith.subf %41, %42 : vector<40x240xf32>
    %44 = arith.mulf %43, %43 : vector<40x240xf32>
    %45 = arith.addf %38, %44 : vector<40x240xf32>
    %46 = vector.extract_strided_slice %8 {offsets = [0, 2], sizes = [40, 1], strides = [1, 1]} : vector<40x3xf32> to vector<40x1xf32>
    %47 = vector.extract_strided_slice %1 {offsets = [2, 0], sizes = [1, 240], strides = [1, 1]} : vector<3x240xf32> to vector<1x240xf32>
    %48 = vector.broadcast %46 : vector<40x1xf32> to vector<40x240xf32>
    %49 = vector.broadcast %47 : vector<1x240xf32> to vector<40x240xf32>
    %50 = arith.subf %48, %49 : vector<40x240xf32>
    %51 = arith.mulf %50, %50 : vector<40x240xf32>
    %52 = arith.addf %45, %51 : vector<40x240xf32>
    %cst_21 = arith.constant dense<0x7F800000> : vector<240xf32>
    %53 = vector.multi_reduction <minimumf>, %32, %cst_21 [0] : vector<40x240xf32> to vector<240xf32>
    %54 = vector.shape_cast %53 : vector<240xf32> to vector<1x240xf32>
    %cst_22 = arith.constant dense<0x7F800000> : vector<240xf32>
    %55 = vector.multi_reduction <minimumf>, %52, %cst_22 [0] : vector<40x240xf32> to vector<240xf32>
    %56 = vector.shape_cast %55 : vector<240xf32> to vector<1x240xf32>
    %57 = arith.mulf %54, %10 : vector<1x240xf32>
    %58 = arith.addf %4, %57 : vector<1x240xf32>
    %59 = arith.mulf %56, %12 : vector<1x240xf32>
    %60 = arith.addf %58, %59 : vector<1x240xf32>
    %c0_23 = arith.constant 0 : index
    %c1 = arith.constant 1 : index
    %c0_24 = arith.constant 0 : index
    %c0_25 = arith.constant 0 : index
    %61 = vector.load %arg1[%c0_23, %c1, %c0_24, %c0_25] : memref<1x6x40x3xf32, #tpu.memory_space<vmem>>, vector<1x1x40x3xf32>
    %62 = vector.shape_cast %61 : vector<1x1x40x3xf32> to vector<40x3xf32>
    %c0_26 = arith.constant 0 : index
    %c1_27 = arith.constant 1 : index
    %c0_28 = arith.constant 0 : index
    %c0_29 = arith.constant 0 : index
    %63 = vector.load %arg2[%c0_26, %c1_27, %c0_28, %c0_29] : memref<1x6x40x3xf32, #tpu.memory_space<vmem>>, vector<1x1x40x3xf32>
    %64 = vector.shape_cast %63 : vector<1x1x40x3xf32> to vector<40x3xf32>
    %c0_30 = arith.constant 0 : index
    %c1_31 = arith.constant 1 : index
    %c0_32 = arith.constant 0 : index
    %c0_33 = arith.constant 0 : index
    %65 = vector.load %arg5[%c0_30, %c1_31, %c0_32, %c0_33] : memref<1x6x1x240xf32, #tpu.memory_space<vmem>>, vector<1x1x1x240xf32>
    %66 = vector.shape_cast %65 : vector<1x1x1x240xf32> to vector<1x240xf32>
    %c0_34 = arith.constant 0 : index
    %c1_35 = arith.constant 1 : index
    %c0_36 = arith.constant 0 : index
    %c0_37 = arith.constant 0 : index
    %67 = vector.load %arg6[%c0_34, %c1_35, %c0_36, %c0_37] : memref<1x6x1x240xf32, #tpu.memory_space<vmem>>, vector<1x1x1x240xf32>
    %68 = vector.shape_cast %67 : vector<1x1x1x240xf32> to vector<1x240xf32>
    %69 = vector.extract_strided_slice %62 {offsets = [0, 0], sizes = [40, 1], strides = [1, 1]} : vector<40x3xf32> to vector<40x1xf32>
    %70 = vector.extract_strided_slice %3 {offsets = [0, 0], sizes = [1, 240], strides = [1, 1]} : vector<3x240xf32> to vector<1x240xf32>
    %71 = vector.broadcast %69 : vector<40x1xf32> to vector<40x240xf32>
    %72 = vector.broadcast %70 : vector<1x240xf32> to vector<40x240xf32>
    %73 = arith.subf %71, %72 : vector<40x240xf32>
    %74 = arith.mulf %73, %73 : vector<40x240xf32>
    %75 = vector.extract_strided_slice %62 {offsets = [0, 1], sizes = [40, 1], strides = [1, 1]} : vector<40x3xf32> to vector<40x1xf32>
    %76 = vector.extract_strided_slice %3 {offsets = [1, 0], sizes = [1, 240], strides = [1, 1]} : vector<3x240xf32> to vector<1x240xf32>
    %77 = vector.broadcast %75 : vector<40x1xf32> to vector<40x240xf32>
    %78 = vector.broadcast %76 : vector<1x240xf32> to vector<40x240xf32>
    %79 = arith.subf %77, %78 : vector<40x240xf32>
    %80 = arith.mulf %79, %79 : vector<40x240xf32>
    %81 = arith.addf %74, %80 : vector<40x240xf32>
    %82 = vector.extract_strided_slice %62 {offsets = [0, 2], sizes = [40, 1], strides = [1, 1]} : vector<40x3xf32> to vector<40x1xf32>
    %83 = vector.extract_strided_slice %3 {offsets = [2, 0], sizes = [1, 240], strides = [1, 1]} : vector<3x240xf32> to vector<1x240xf32>
    %84 = vector.broadcast %82 : vector<40x1xf32> to vector<40x240xf32>
    %85 = vector.broadcast %83 : vector<1x240xf32> to vector<40x240xf32>
    %86 = arith.subf %84, %85 : vector<40x240xf32>
    %87 = arith.mulf %86, %86 : vector<40x240xf32>
    %88 = arith.addf %81, %87 : vector<40x240xf32>
    %89 = vector.extract_strided_slice %64 {offsets = [0, 0], sizes = [40, 1], strides = [1, 1]} : vector<40x3xf32> to vector<40x1xf32>
    %90 = vector.extract_strided_slice %1 {offsets = [0, 0], sizes = [1, 240], strides = [1, 1]} : vector<3x240xf32> to vector<1x240xf32>
    %91 = vector.broadcast %89 : vector<40x1xf32> to vector<40x240xf32>
    %92 = vector.broadcast %90 : vector<1x240xf32> to vector<40x240xf32>
    %93 = arith.subf %91, %92 : vector<40x240xf32>
    %94 = arith.mulf %93, %93 : vector<40x240xf32>
    %95 = vector.extract_strided_slice %64 {offsets = [0, 1], sizes = [40, 1], strides = [1, 1]} : vector<40x3xf32> to vector<40x1xf32>
    %96 = vector.extract_strided_slice %1 {offsets = [1, 0], sizes = [1, 240], strides = [1, 1]} : vector<3x240xf32> to vector<1x240xf32>
    %97 = vector.broadcast %95 : vector<40x1xf32> to vector<40x240xf32>
    %98 = vector.broadcast %96 : vector<1x240xf32> to vector<40x240xf32>
    %99 = arith.subf %97, %98 : vector<40x240xf32>
    %100 = arith.mulf %99, %99 : vector<40x240xf32>
    %101 = arith.addf %94, %100 : vector<40x240xf32>
    %102 = vector.extract_strided_slice %64 {offsets = [0, 2], sizes = [40, 1], strides = [1, 1]} : vector<40x3xf32> to vector<40x1xf32>
    %103 = vector.extract_strided_slice %1 {offsets = [2, 0], sizes = [1, 240], strides = [1, 1]} : vector<3x240xf32> to vector<1x240xf32>
    %104 = vector.broadcast %102 : vector<40x1xf32> to vector<40x240xf32>
    %105 = vector.broadcast %103 : vector<1x240xf32> to vector<40x240xf32>
    %106 = arith.subf %104, %105 : vector<40x240xf32>
    %107 = arith.mulf %106, %106 : vector<40x240xf32>
    %108 = arith.addf %101, %107 : vector<40x240xf32>
    %cst_38 = arith.constant dense<0x7F800000> : vector<240xf32>
    %109 = vector.multi_reduction <minimumf>, %88, %cst_38 [0] : vector<40x240xf32> to vector<240xf32>
    %110 = vector.shape_cast %109 : vector<240xf32> to vector<1x240xf32>
    %cst_39 = arith.constant dense<0x7F800000> : vector<240xf32>
    %111 = vector.multi_reduction <minimumf>, %108, %cst_39 [0] : vector<40x240xf32> to vector<240xf32>
    %112 = vector.shape_cast %111 : vector<240xf32> to vector<1x240xf32>
    %113 = arith.mulf %110, %66 : vector<1x240xf32>
    %114 = arith.addf %60, %113 : vector<1x240xf32>
    %115 = arith.mulf %112, %68 : vector<1x240xf32>
    %116 = arith.addf %114, %115 : vector<1x240xf32>
    %c0_40 = arith.constant 0 : index
    %c2 = arith.constant 2 : index
    %c0_41 = arith.constant 0 : index
    %c0_42 = arith.constant 0 : index
    %117 = vector.load %arg1[%c0_40, %c2, %c0_41, %c0_42] : memref<1x6x40x3xf32, #tpu.memory_space<vmem>>, vector<1x1x40x3xf32>
    %118 = vector.shape_cast %117 : vector<1x1x40x3xf32> to vector<40x3xf32>
    %c0_43 = arith.constant 0 : index
    %c2_44 = arith.constant 2 : index
    %c0_45 = arith.constant 0 : index
    %c0_46 = arith.constant 0 : index
    %119 = vector.load %arg2[%c0_43, %c2_44, %c0_45, %c0_46] : memref<1x6x40x3xf32, #tpu.memory_space<vmem>>, vector<1x1x40x3xf32>
    %120 = vector.shape_cast %119 : vector<1x1x40x3xf32> to vector<40x3xf32>
    %c0_47 = arith.constant 0 : index
    %c2_48 = arith.constant 2 : index
    %c0_49 = arith.constant 0 : index
    %c0_50 = arith.constant 0 : index
    %121 = vector.load %arg5[%c0_47, %c2_48, %c0_49, %c0_50] : memref<1x6x1x240xf32, #tpu.memory_space<vmem>>, vector<1x1x1x240xf32>
    %122 = vector.shape_cast %121 : vector<1x1x1x240xf32> to vector<1x240xf32>
    %c0_51 = arith.constant 0 : index
    %c2_52 = arith.constant 2 : index
    %c0_53 = arith.constant 0 : index
    %c0_54 = arith.constant 0 : index
    %123 = vector.load %arg6[%c0_51, %c2_52, %c0_53, %c0_54] : memref<1x6x1x240xf32, #tpu.memory_space<vmem>>, vector<1x1x1x240xf32>
    %124 = vector.shape_cast %123 : vector<1x1x1x240xf32> to vector<1x240xf32>
    %125 = vector.extract_strided_slice %118 {offsets = [0, 0], sizes = [40, 1], strides = [1, 1]} : vector<40x3xf32> to vector<40x1xf32>
    %126 = vector.extract_strided_slice %3 {offsets = [0, 0], sizes = [1, 240], strides = [1, 1]} : vector<3x240xf32> to vector<1x240xf32>
    %127 = vector.broadcast %125 : vector<40x1xf32> to vector<40x240xf32>
    %128 = vector.broadcast %126 : vector<1x240xf32> to vector<40x240xf32>
    %129 = arith.subf %127, %128 : vector<40x240xf32>
    %130 = arith.mulf %129, %129 : vector<40x240xf32>
    %131 = vector.extract_strided_slice %118 {offsets = [0, 1], sizes = [40, 1], strides = [1, 1]} : vector<40x3xf32> to vector<40x1xf32>
    %132 = vector.extract_strided_slice %3 {offsets = [1, 0], sizes = [1, 240], strides = [1, 1]} : vector<3x240xf32> to vector<1x240xf32>
    %133 = vector.broadcast %131 : vector<40x1xf32> to vector<40x240xf32>
    %134 = vector.broadcast %132 : vector<1x240xf32> to vector<40x240xf32>
    %135 = arith.subf %133, %134 : vector<40x240xf32>
    %136 = arith.mulf %135, %135 : vector<40x240xf32>
    %137 = arith.addf %130, %136 : vector<40x240xf32>
    %138 = vector.extract_strided_slice %118 {offsets = [0, 2], sizes = [40, 1], strides = [1, 1]} : vector<40x3xf32> to vector<40x1xf32>
    %139 = vector.extract_strided_slice %3 {offsets = [2, 0], sizes = [1, 240], strides = [1, 1]} : vector<3x240xf32> to vector<1x240xf32>
    %140 = vector.broadcast %138 : vector<40x1xf32> to vector<40x240xf32>
    %141 = vector.broadcast %139 : vector<1x240xf32> to vector<40x240xf32>
    %142 = arith.subf %140, %141 : vector<40x240xf32>
    %143 = arith.mulf %142, %142 : vector<40x240xf32>
    %144 = arith.addf %137, %143 : vector<40x240xf32>
    %145 = vector.extract_strided_slice %120 {offsets = [0, 0], sizes = [40, 1], strides = [1, 1]} : vector<40x3xf32> to vector<40x1xf32>
    %146 = vector.extract_strided_slice %1 {offsets = [0, 0], sizes = [1, 240], strides = [1, 1]} : vector<3x240xf32> to vector<1x240xf32>
    %147 = vector.broadcast %145 : vector<40x1xf32> to vector<40x240xf32>
    %148 = vector.broadcast %146 : vector<1x240xf32> to vector<40x240xf32>
    %149 = arith.subf %147, %148 : vector<40x240xf32>
    %150 = arith.mulf %149, %149 : vector<40x240xf32>
    %151 = vector.extract_strided_slice %120 {offsets = [0, 1], sizes = [40, 1], strides = [1, 1]} : vector<40x3xf32> to vector<40x1xf32>
    %152 = vector.extract_strided_slice %1 {offsets = [1, 0], sizes = [1, 240], strides = [1, 1]} : vector<3x240xf32> to vector<1x240xf32>
    %153 = vector.broadcast %151 : vector<40x1xf32> to vector<40x240xf32>
    %154 = vector.broadcast %152 : vector<1x240xf32> to vector<40x240xf32>
    %155 = arith.subf %153, %154 : vector<40x240xf32>
    %156 = arith.mulf %155, %155 : vector<40x240xf32>
    %157 = arith.addf %150, %156 : vector<40x240xf32>
    %158 = vector.extract_strided_slice %120 {offsets = [0, 2], sizes = [40, 1], strides = [1, 1]} : vector<40x3xf32> to vector<40x1xf32>
    %159 = vector.extract_strided_slice %1 {offsets = [2, 0], sizes = [1, 240], strides = [1, 1]} : vector<3x240xf32> to vector<1x240xf32>
    %160 = vector.broadcast %158 : vector<40x1xf32> to vector<40x240xf32>
    %161 = vector.broadcast %159 : vector<1x240xf32> to vector<40x240xf32>
    %162 = arith.subf %160, %161 : vector<40x240xf32>
    %163 = arith.mulf %162, %162 : vector<40x240xf32>
    %164 = arith.addf %157, %163 : vector<40x240xf32>
    %cst_55 = arith.constant dense<0x7F800000> : vector<240xf32>
    %165 = vector.multi_reduction <minimumf>, %144, %cst_55 [0] : vector<40x240xf32> to vector<240xf32>
    %166 = vector.shape_cast %165 : vector<240xf32> to vector<1x240xf32>
    %cst_56 = arith.constant dense<0x7F800000> : vector<240xf32>
    %167 = vector.multi_reduction <minimumf>, %164, %cst_56 [0] : vector<40x240xf32> to vector<240xf32>
    %168 = vector.shape_cast %167 : vector<240xf32> to vector<1x240xf32>
    %169 = arith.mulf %166, %122 : vector<1x240xf32>
    %170 = arith.addf %116, %169 : vector<1x240xf32>
    %171 = arith.mulf %168, %124 : vector<1x240xf32>
    %172 = arith.addf %170, %171 : vector<1x240xf32>
    %c0_57 = arith.constant 0 : index
    %c3 = arith.constant 3 : index
    %c0_58 = arith.constant 0 : index
    %c0_59 = arith.constant 0 : index
    %173 = vector.load %arg1[%c0_57, %c3, %c0_58, %c0_59] : memref<1x6x40x3xf32, #tpu.memory_space<vmem>>, vector<1x1x40x3xf32>
    %174 = vector.shape_cast %173 : vector<1x1x40x3xf32> to vector<40x3xf32>
    %c0_60 = arith.constant 0 : index
    %c3_61 = arith.constant 3 : index
    %c0_62 = arith.constant 0 : index
    %c0_63 = arith.constant 0 : index
    %175 = vector.load %arg2[%c0_60, %c3_61, %c0_62, %c0_63] : memref<1x6x40x3xf32, #tpu.memory_space<vmem>>, vector<1x1x40x3xf32>
    %176 = vector.shape_cast %175 : vector<1x1x40x3xf32> to vector<40x3xf32>
    %c0_64 = arith.constant 0 : index
    %c3_65 = arith.constant 3 : index
    %c0_66 = arith.constant 0 : index
    %c0_67 = arith.constant 0 : index
    %177 = vector.load %arg5[%c0_64, %c3_65, %c0_66, %c0_67] : memref<1x6x1x240xf32, #tpu.memory_space<vmem>>, vector<1x1x1x240xf32>
    %178 = vector.shape_cast %177 : vector<1x1x1x240xf32> to vector<1x240xf32>
    %c0_68 = arith.constant 0 : index
    %c3_69 = arith.constant 3 : index
    %c0_70 = arith.constant 0 : index
    %c0_71 = arith.constant 0 : index
    %179 = vector.load %arg6[%c0_68, %c3_69, %c0_70, %c0_71] : memref<1x6x1x240xf32, #tpu.memory_space<vmem>>, vector<1x1x1x240xf32>
    %180 = vector.shape_cast %179 : vector<1x1x1x240xf32> to vector<1x240xf32>
    %181 = vector.extract_strided_slice %174 {offsets = [0, 0], sizes = [40, 1], strides = [1, 1]} : vector<40x3xf32> to vector<40x1xf32>
    %182 = vector.extract_strided_slice %3 {offsets = [0, 0], sizes = [1, 240], strides = [1, 1]} : vector<3x240xf32> to vector<1x240xf32>
    %183 = vector.broadcast %181 : vector<40x1xf32> to vector<40x240xf32>
    %184 = vector.broadcast %182 : vector<1x240xf32> to vector<40x240xf32>
    %185 = arith.subf %183, %184 : vector<40x240xf32>
    %186 = arith.mulf %185, %185 : vector<40x240xf32>
    %187 = vector.extract_strided_slice %174 {offsets = [0, 1], sizes = [40, 1], strides = [1, 1]} : vector<40x3xf32> to vector<40x1xf32>
    %188 = vector.extract_strided_slice %3 {offsets = [1, 0], sizes = [1, 240], strides = [1, 1]} : vector<3x240xf32> to vector<1x240xf32>
    %189 = vector.broadcast %187 : vector<40x1xf32> to vector<40x240xf32>
    %190 = vector.broadcast %188 : vector<1x240xf32> to vector<40x240xf32>
    %191 = arith.subf %189, %190 : vector<40x240xf32>
    %192 = arith.mulf %191, %191 : vector<40x240xf32>
    %193 = arith.addf %186, %192 : vector<40x240xf32>
    %194 = vector.extract_strided_slice %174 {offsets = [0, 2], sizes = [40, 1], strides = [1, 1]} : vector<40x3xf32> to vector<40x1xf32>
    %195 = vector.extract_strided_slice %3 {offsets = [2, 0], sizes = [1, 240], strides = [1, 1]} : vector<3x240xf32> to vector<1x240xf32>
    %196 = vector.broadcast %194 : vector<40x1xf32> to vector<40x240xf32>
    %197 = vector.broadcast %195 : vector<1x240xf32> to vector<40x240xf32>
    %198 = arith.subf %196, %197 : vector<40x240xf32>
    %199 = arith.mulf %198, %198 : vector<40x240xf32>
    %200 = arith.addf %193, %199 : vector<40x240xf32>
    %201 = vector.extract_strided_slice %176 {offsets = [0, 0], sizes = [40, 1], strides = [1, 1]} : vector<40x3xf32> to vector<40x1xf32>
    %202 = vector.extract_strided_slice %1 {offsets = [0, 0], sizes = [1, 240], strides = [1, 1]} : vector<3x240xf32> to vector<1x240xf32>
    %203 = vector.broadcast %201 : vector<40x1xf32> to vector<40x240xf32>
    %204 = vector.broadcast %202 : vector<1x240xf32> to vector<40x240xf32>
    %205 = arith.subf %203, %204 : vector<40x240xf32>
    %206 = arith.mulf %205, %205 : vector<40x240xf32>
    %207 = vector.extract_strided_slice %176 {offsets = [0, 1], sizes = [40, 1], strides = [1, 1]} : vector<40x3xf32> to vector<40x1xf32>
    %208 = vector.extract_strided_slice %1 {offsets = [1, 0], sizes = [1, 240], strides = [1, 1]} : vector<3x240xf32> to vector<1x240xf32>
    %209 = vector.broadcast %207 : vector<40x1xf32> to vector<40x240xf32>
    %210 = vector.broadcast %208 : vector<1x240xf32> to vector<40x240xf32>
    %211 = arith.subf %209, %210 : vector<40x240xf32>
    %212 = arith.mulf %211, %211 : vector<40x240xf32>
    %213 = arith.addf %206, %212 : vector<40x240xf32>
    %214 = vector.extract_strided_slice %176 {offsets = [0, 2], sizes = [40, 1], strides = [1, 1]} : vector<40x3xf32> to vector<40x1xf32>
    %215 = vector.extract_strided_slice %1 {offsets = [2, 0], sizes = [1, 240], strides = [1, 1]} : vector<3x240xf32> to vector<1x240xf32>
    %216 = vector.broadcast %214 : vector<40x1xf32> to vector<40x240xf32>
    %217 = vector.broadcast %215 : vector<1x240xf32> to vector<40x240xf32>
    %218 = arith.subf %216, %217 : vector<40x240xf32>
    %219 = arith.mulf %218, %218 : vector<40x240xf32>
    %220 = arith.addf %213, %219 : vector<40x240xf32>
    %cst_72 = arith.constant dense<0x7F800000> : vector<240xf32>
    %221 = vector.multi_reduction <minimumf>, %200, %cst_72 [0] : vector<40x240xf32> to vector<240xf32>
    %222 = vector.shape_cast %221 : vector<240xf32> to vector<1x240xf32>
    %cst_73 = arith.constant dense<0x7F800000> : vector<240xf32>
    %223 = vector.multi_reduction <minimumf>, %220, %cst_73 [0] : vector<40x240xf32> to vector<240xf32>
    %224 = vector.shape_cast %223 : vector<240xf32> to vector<1x240xf32>
    %225 = arith.mulf %222, %178 : vector<1x240xf32>
    %226 = arith.addf %172, %225 : vector<1x240xf32>
    %227 = arith.mulf %224, %180 : vector<1x240xf32>
    %228 = arith.addf %226, %227 : vector<1x240xf32>
    %c0_74 = arith.constant 0 : index
    %c4 = arith.constant 4 : index
    %c0_75 = arith.constant 0 : index
    %c0_76 = arith.constant 0 : index
    %229 = vector.load %arg1[%c0_74, %c4, %c0_75, %c0_76] : memref<1x6x40x3xf32, #tpu.memory_space<vmem>>, vector<1x1x40x3xf32>
    %230 = vector.shape_cast %229 : vector<1x1x40x3xf32> to vector<40x3xf32>
    %c0_77 = arith.constant 0 : index
    %c4_78 = arith.constant 4 : index
    %c0_79 = arith.constant 0 : index
    %c0_80 = arith.constant 0 : index
    %231 = vector.load %arg2[%c0_77, %c4_78, %c0_79, %c0_80] : memref<1x6x40x3xf32, #tpu.memory_space<vmem>>, vector<1x1x40x3xf32>
    %232 = vector.shape_cast %231 : vector<1x1x40x3xf32> to vector<40x3xf32>
    %c0_81 = arith.constant 0 : index
    %c4_82 = arith.constant 4 : index
    %c0_83 = arith.constant 0 : index
    %c0_84 = arith.constant 0 : index
    %233 = vector.load %arg5[%c0_81, %c4_82, %c0_83, %c0_84] : memref<1x6x1x240xf32, #tpu.memory_space<vmem>>, vector<1x1x1x240xf32>
    %234 = vector.shape_cast %233 : vector<1x1x1x240xf32> to vector<1x240xf32>
    %c0_85 = arith.constant 0 : index
    %c4_86 = arith.constant 4 : index
    %c0_87 = arith.constant 0 : index
    %c0_88 = arith.constant 0 : index
    %235 = vector.load %arg6[%c0_85, %c4_86, %c0_87, %c0_88] : memref<1x6x1x240xf32, #tpu.memory_space<vmem>>, vector<1x1x1x240xf32>
    %236 = vector.shape_cast %235 : vector<1x1x1x240xf32> to vector<1x240xf32>
    %237 = vector.extract_strided_slice %230 {offsets = [0, 0], sizes = [40, 1], strides = [1, 1]} : vector<40x3xf32> to vector<40x1xf32>
    %238 = vector.extract_strided_slice %3 {offsets = [0, 0], sizes = [1, 240], strides = [1, 1]} : vector<3x240xf32> to vector<1x240xf32>
    %239 = vector.broadcast %237 : vector<40x1xf32> to vector<40x240xf32>
    %240 = vector.broadcast %238 : vector<1x240xf32> to vector<40x240xf32>
    %241 = arith.subf %239, %240 : vector<40x240xf32>
    %242 = arith.mulf %241, %241 : vector<40x240xf32>
    %243 = vector.extract_strided_slice %230 {offsets = [0, 1], sizes = [40, 1], strides = [1, 1]} : vector<40x3xf32> to vector<40x1xf32>
    %244 = vector.extract_strided_slice %3 {offsets = [1, 0], sizes = [1, 240], strides = [1, 1]} : vector<3x240xf32> to vector<1x240xf32>
    %245 = vector.broadcast %243 : vector<40x1xf32> to vector<40x240xf32>
    %246 = vector.broadcast %244 : vector<1x240xf32> to vector<40x240xf32>
    %247 = arith.subf %245, %246 : vector<40x240xf32>
    %248 = arith.mulf %247, %247 : vector<40x240xf32>
    %249 = arith.addf %242, %248 : vector<40x240xf32>
    %250 = vector.extract_strided_slice %230 {offsets = [0, 2], sizes = [40, 1], strides = [1, 1]} : vector<40x3xf32> to vector<40x1xf32>
    %251 = vector.extract_strided_slice %3 {offsets = [2, 0], sizes = [1, 240], strides = [1, 1]} : vector<3x240xf32> to vector<1x240xf32>
    %252 = vector.broadcast %250 : vector<40x1xf32> to vector<40x240xf32>
    %253 = vector.broadcast %251 : vector<1x240xf32> to vector<40x240xf32>
    %254 = arith.subf %252, %253 : vector<40x240xf32>
    %255 = arith.mulf %254, %254 : vector<40x240xf32>
    %256 = arith.addf %249, %255 : vector<40x240xf32>
    %257 = vector.extract_strided_slice %232 {offsets = [0, 0], sizes = [40, 1], strides = [1, 1]} : vector<40x3xf32> to vector<40x1xf32>
    %258 = vector.extract_strided_slice %1 {offsets = [0, 0], sizes = [1, 240], strides = [1, 1]} : vector<3x240xf32> to vector<1x240xf32>
    %259 = vector.broadcast %257 : vector<40x1xf32> to vector<40x240xf32>
    %260 = vector.broadcast %258 : vector<1x240xf32> to vector<40x240xf32>
    %261 = arith.subf %259, %260 : vector<40x240xf32>
    %262 = arith.mulf %261, %261 : vector<40x240xf32>
    %263 = vector.extract_strided_slice %232 {offsets = [0, 1], sizes = [40, 1], strides = [1, 1]} : vector<40x3xf32> to vector<40x1xf32>
    %264 = vector.extract_strided_slice %1 {offsets = [1, 0], sizes = [1, 240], strides = [1, 1]} : vector<3x240xf32> to vector<1x240xf32>
    %265 = vector.broadcast %263 : vector<40x1xf32> to vector<40x240xf32>
    %266 = vector.broadcast %264 : vector<1x240xf32> to vector<40x240xf32>
    %267 = arith.subf %265, %266 : vector<40x240xf32>
    %268 = arith.mulf %267, %267 : vector<40x240xf32>
    %269 = arith.addf %262, %268 : vector<40x240xf32>
    %270 = vector.extract_strided_slice %232 {offsets = [0, 2], sizes = [40, 1], strides = [1, 1]} : vector<40x3xf32> to vector<40x1xf32>
    %271 = vector.extract_strided_slice %1 {offsets = [2, 0], sizes = [1, 240], strides = [1, 1]} : vector<3x240xf32> to vector<1x240xf32>
    %272 = vector.broadcast %270 : vector<40x1xf32> to vector<40x240xf32>
    %273 = vector.broadcast %271 : vector<1x240xf32> to vector<40x240xf32>
    %274 = arith.subf %272, %273 : vector<40x240xf32>
    %275 = arith.mulf %274, %274 : vector<40x240xf32>
    %276 = arith.addf %269, %275 : vector<40x240xf32>
    %cst_89 = arith.constant dense<0x7F800000> : vector<240xf32>
    %277 = vector.multi_reduction <minimumf>, %256, %cst_89 [0] : vector<40x240xf32> to vector<240xf32>
    %278 = vector.shape_cast %277 : vector<240xf32> to vector<1x240xf32>
    %cst_90 = arith.constant dense<0x7F800000> : vector<240xf32>
    %279 = vector.multi_reduction <minimumf>, %276, %cst_90 [0] : vector<40x240xf32> to vector<240xf32>
    %280 = vector.shape_cast %279 : vector<240xf32> to vector<1x240xf32>
    %281 = arith.mulf %278, %234 : vector<1x240xf32>
    %282 = arith.addf %228, %281 : vector<1x240xf32>
    %283 = arith.mulf %280, %236 : vector<1x240xf32>
    %284 = arith.addf %282, %283 : vector<1x240xf32>
    %c0_91 = arith.constant 0 : index
    %c5 = arith.constant 5 : index
    %c0_92 = arith.constant 0 : index
    %c0_93 = arith.constant 0 : index
    %285 = vector.load %arg1[%c0_91, %c5, %c0_92, %c0_93] : memref<1x6x40x3xf32, #tpu.memory_space<vmem>>, vector<1x1x40x3xf32>
    %286 = vector.shape_cast %285 : vector<1x1x40x3xf32> to vector<40x3xf32>
    %c0_94 = arith.constant 0 : index
    %c5_95 = arith.constant 5 : index
    %c0_96 = arith.constant 0 : index
    %c0_97 = arith.constant 0 : index
    %287 = vector.load %arg2[%c0_94, %c5_95, %c0_96, %c0_97] : memref<1x6x40x3xf32, #tpu.memory_space<vmem>>, vector<1x1x40x3xf32>
    %288 = vector.shape_cast %287 : vector<1x1x40x3xf32> to vector<40x3xf32>
    %c0_98 = arith.constant 0 : index
    %c5_99 = arith.constant 5 : index
    %c0_100 = arith.constant 0 : index
    %c0_101 = arith.constant 0 : index
    %289 = vector.load %arg5[%c0_98, %c5_99, %c0_100, %c0_101] : memref<1x6x1x240xf32, #tpu.memory_space<vmem>>, vector<1x1x1x240xf32>
    %290 = vector.shape_cast %289 : vector<1x1x1x240xf32> to vector<1x240xf32>
    %c0_102 = arith.constant 0 : index
    %c5_103 = arith.constant 5 : index
    %c0_104 = arith.constant 0 : index
    %c0_105 = arith.constant 0 : index
    %291 = vector.load %arg6[%c0_102, %c5_103, %c0_104, %c0_105] : memref<1x6x1x240xf32, #tpu.memory_space<vmem>>, vector<1x1x1x240xf32>
    %292 = vector.shape_cast %291 : vector<1x1x1x240xf32> to vector<1x240xf32>
    %293 = vector.extract_strided_slice %286 {offsets = [0, 0], sizes = [40, 1], strides = [1, 1]} : vector<40x3xf32> to vector<40x1xf32>
    %294 = vector.extract_strided_slice %3 {offsets = [0, 0], sizes = [1, 240], strides = [1, 1]} : vector<3x240xf32> to vector<1x240xf32>
    %295 = vector.broadcast %293 : vector<40x1xf32> to vector<40x240xf32>
    %296 = vector.broadcast %294 : vector<1x240xf32> to vector<40x240xf32>
    %297 = arith.subf %295, %296 : vector<40x240xf32>
    %298 = arith.mulf %297, %297 : vector<40x240xf32>
    %299 = vector.extract_strided_slice %286 {offsets = [0, 1], sizes = [40, 1], strides = [1, 1]} : vector<40x3xf32> to vector<40x1xf32>
    %300 = vector.extract_strided_slice %3 {offsets = [1, 0], sizes = [1, 240], strides = [1, 1]} : vector<3x240xf32> to vector<1x240xf32>
    %301 = vector.broadcast %299 : vector<40x1xf32> to vector<40x240xf32>
    %302 = vector.broadcast %300 : vector<1x240xf32> to vector<40x240xf32>
    %303 = arith.subf %301, %302 : vector<40x240xf32>
    %304 = arith.mulf %303, %303 : vector<40x240xf32>
    %305 = arith.addf %298, %304 : vector<40x240xf32>
    %306 = vector.extract_strided_slice %286 {offsets = [0, 2], sizes = [40, 1], strides = [1, 1]} : vector<40x3xf32> to vector<40x1xf32>
    %307 = vector.extract_strided_slice %3 {offsets = [2, 0], sizes = [1, 240], strides = [1, 1]} : vector<3x240xf32> to vector<1x240xf32>
    %308 = vector.broadcast %306 : vector<40x1xf32> to vector<40x240xf32>
    %309 = vector.broadcast %307 : vector<1x240xf32> to vector<40x240xf32>
    %310 = arith.subf %308, %309 : vector<40x240xf32>
    %311 = arith.mulf %310, %310 : vector<40x240xf32>
    %312 = arith.addf %305, %311 : vector<40x240xf32>
    %313 = vector.extract_strided_slice %288 {offsets = [0, 0], sizes = [40, 1], strides = [1, 1]} : vector<40x3xf32> to vector<40x1xf32>
    %314 = vector.extract_strided_slice %1 {offsets = [0, 0], sizes = [1, 240], strides = [1, 1]} : vector<3x240xf32> to vector<1x240xf32>
    %315 = vector.broadcast %313 : vector<40x1xf32> to vector<40x240xf32>
    %316 = vector.broadcast %314 : vector<1x240xf32> to vector<40x240xf32>
    %317 = arith.subf %315, %316 : vector<40x240xf32>
    %318 = arith.mulf %317, %317 : vector<40x240xf32>
    %319 = vector.extract_strided_slice %288 {offsets = [0, 1], sizes = [40, 1], strides = [1, 1]} : vector<40x3xf32> to vector<40x1xf32>
    %320 = vector.extract_strided_slice %1 {offsets = [1, 0], sizes = [1, 240], strides = [1, 1]} : vector<3x240xf32> to vector<1x240xf32>
    %321 = vector.broadcast %319 : vector<40x1xf32> to vector<40x240xf32>
    %322 = vector.broadcast %320 : vector<1x240xf32> to vector<40x240xf32>
    %323 = arith.subf %321, %322 : vector<40x240xf32>
    %324 = arith.mulf %323, %323 : vector<40x240xf32>
    %325 = arith.addf %318, %324 : vector<40x240xf32>
    %326 = vector.extract_strided_slice %288 {offsets = [0, 2], sizes = [40, 1], strides = [1, 1]} : vector<40x3xf32> to vector<40x1xf32>
    %327 = vector.extract_strided_slice %1 {offsets = [2, 0], sizes = [1, 240], strides = [1, 1]} : vector<3x240xf32> to vector<1x240xf32>
    %328 = vector.broadcast %326 : vector<40x1xf32> to vector<40x240xf32>
    %329 = vector.broadcast %327 : vector<1x240xf32> to vector<40x240xf32>
    %330 = arith.subf %328, %329 : vector<40x240xf32>
    %331 = arith.mulf %330, %330 : vector<40x240xf32>
    %332 = arith.addf %325, %331 : vector<40x240xf32>
    %cst_106 = arith.constant dense<0x7F800000> : vector<240xf32>
    %333 = vector.multi_reduction <minimumf>, %312, %cst_106 [0] : vector<40x240xf32> to vector<240xf32>
    %334 = vector.shape_cast %333 : vector<240xf32> to vector<1x240xf32>
    %cst_107 = arith.constant dense<0x7F800000> : vector<240xf32>
    %335 = vector.multi_reduction <minimumf>, %332, %cst_107 [0] : vector<40x240xf32> to vector<240xf32>
    %336 = vector.shape_cast %335 : vector<240xf32> to vector<1x240xf32>
    %337 = arith.mulf %334, %290 : vector<1x240xf32>
    %338 = arith.addf %284, %337 : vector<1x240xf32>
    %339 = arith.mulf %336, %292 : vector<1x240xf32>
    %340 = arith.addf %338, %339 : vector<1x240xf32>
    %341 = vector.shape_cast %340 : vector<1x240xf32> to vector<1x1x240xf32>
    %cst_108 = arith.constant dense<0.000000e+00> : vector<1xf32>
    %342 = vector.multi_reduction <add>, %341, %cst_108 [1, 2] : vector<1x1x240xf32> to vector<1xf32>
    %343 = vector.shape_cast %342 : vector<1xf32> to vector<1x1x1xf32>
    %344 = vector.extract %343[0, 0, 0] : f32 from vector<1x1x1xf32>
    %cst_109 = arith.constant 2.500000e-02 : f32
    %345 = arith.mulf %cst_109, %344 : f32
    %cst_110 = arith.constant 0.000000e+00 : f32
    %346 = vector.broadcast %cst_110 : f32 to vector<1x1x1xf32>
    %347 = vector.broadcast %345 : f32 to vector<1x1x1xf32>
    %348 = arith.addf %346, %347 : vector<1x1x1xf32>
    %c0_111 = arith.constant 0 : index
    %c0_112 = arith.constant 0 : index
    %c0_113 = arith.constant 0 : index
    %349 = vector.load %arg7[%c0_111, %c0_112, %c0_113] : memref<1x1x1xf32, #tpu.memory_space<vmem>>, vector<1x1x1xf32>
    tpu.vector_store %arg7[%c0_111, %c0_112, %c0_113], %348 {strides = array<i32>} : memref<1x1x1xf32, #tpu.memory_space<vmem>>, vector<1x1x1xf32>,
    return
  }
  func.func @transform_0(%arg0: i32) -> (i32, i32, i32, i32) {
    %c0_i32 = arith.constant 0 : i32
    %c0_i32_0 = arith.constant 0 : i32
    %c0_i32_1 = arith.constant 0 : i32
    %c0_i32_2 = arith.constant 0 : i32
    return %arg0, %c0_i32, %c0_i32_0, %c0_i32_1 : i32, i32, i32, i32
  }
  func.func @transform_1(%arg0: i32) -> (i32, i32, i32, i32) {
    %c0_i32 = arith.constant 0 : i32
    %c0_i32_0 = arith.constant 0 : i32
    %c0_i32_1 = arith.constant 0 : i32
    %c0_i32_2 = arith.constant 0 : i32
    return %arg0, %c0_i32, %c0_i32_0, %c0_i32_1 : i32, i32, i32, i32
  }
  func.func @transform_2(%arg0: i32) -> (i32, i32, i32) {
    %c0_i32 = arith.constant 0 : i32
    %c0_i32_0 = arith.constant 0 : i32
    %c0_i32_1 = arith.constant 0 : i32
    return %arg0, %c0_i32, %c0_i32_0 : i32, i32, i32
  }
  func.func @transform_3(%arg0: i32) -> (i32, i32, i32) {
    %c0_i32 = arith.constant 0 : i32
    %c0_i32_0 = arith.constant 0 : i32
    %c0_i32_1 = arith.constant 0 : i32
    return %arg0, %c0_i32, %c0_i32_0 : i32, i32, i32
  }
  func.func @transform_4(%arg0: i32) -> (i32, i32, i32, i32) {
    %c0_i32 = arith.constant 0 : i32
    %c0_i32_0 = arith.constant 0 : i32
    %c0_i32_1 = arith.constant 0 : i32
    %c0_i32_2 = arith.constant 0 : i32
    return %arg0, %c0_i32, %c0_i32_0, %c0_i32_1 : i32, i32, i32, i32
  }
  func.func @transform_5(%arg0: i32) -> (i32, i32, i32, i32) {
    %c0_i32 = arith.constant 0 : i32
    %c0_i32_0 = arith.constant 0 : i32
    %c0_i32_1 = arith.constant 0 : i32
    %c0_i32_2 = arith.constant 0 : i32
    return %arg0, %c0_i32, %c0_i32_0, %c0_i32_1 : i32, i32, i32, i32
  }
  func.func @transform_6(%arg0: i32) -> (i32, i32, i32) {
    %c0_i32 = arith.constant 0 : i32
    %c0_i32_0 = arith.constant 0 : i32
    %c0_i32_1 = arith.constant 0 : i32
    return %arg0, %c0_i32, %c0_i32_0 : i32, i32, i32
  }
}

</mosaic_0001>

<llo_original>
// kernel: tpu_custom_call.1
$region0: #{tpu_custom_call.1}
  #allocation0 [shape = 'u32[]', space=smem, size = 0x4, offset = 0x4, fixed_abs, tag = 'smem constant byte address 0x4 - core index']
  #allocation1 [shape = 'u32[144,128]{1,0:T(1,128)}', space=vmem, size = 0x12000, scoped, tag = 'internal scratch']
  %s0 = inlined_call_operand.vmem [shape: f32[2,6,40,3], index: 0, kind: input, shape index: {}]
  %s1 = inlined_call_operand.vmem [shape: f32[2,6,40,3], index: 1, kind: input, shape index: {}]
  %s2 = inlined_call_operand.vmem [shape: f32[2,3,240], index: 2, kind: input, shape index: {}]
  %s3 = inlined_call_operand.vmem [shape: f32[2,3,240], index: 3, kind: input, shape index: {}]
  %s4 = inlined_call_operand.vmem [shape: f32[2,6,1,240], index: 4, kind: input, shape index: {}]
  %s5 = inlined_call_operand.vmem [shape: f32[2,6,1,240], index: 5, kind: input, shape index: {}]
  %s6 = inlined_call_operand.vmem [shape: f32[2,1,1], index: 6, kind: output, shape index: {}]
  %s7 = sld [smem:[#allocation0]]
  $region57: #{tpu_custom_call.1} parent=0
    _
  %s9 = ssub.s32 1, %s7
  %s10 = scalar_select 0, %s9, %s7
  loop: start=0, step=1, limit=4
  $region2: #{tpu_custom_call.1} parent=0 // loop_pre_header
    _
  $region3: #{tpu_custom_call.1} parent=0 // loop_header
    %s12 = sphi 0, %s16
    %p13 = scmp.ge.s32.totalorder %s12, 4
    %s22 = sphi 0, %s24
    %s25 = sphi 0, %s22
    %s26 = sphi 0, %s25
    %s42 = sphi 0, %s26
    %s48 = sphi 0, %s50
    %s51 = sphi 0, %s48
    %s52 = sphi 0, %s51
    %s68 = sphi 0, %s52
    %s74 = sphi 0, %s76
    %s77 = sphi 0, %s74
    %s78 = sphi 0, %s77
    %s94 = sphi 0, %s78
    %s100 = sphi 0, %s102
    %s103 = sphi 0, %s100
    %s104 = sphi 0, %s103
    %s120 = sphi 0, %s104
    %s126 = sphi 0, %s128
    %s129 = sphi 0, %s126
    %s130 = sphi 0, %s129
    %s146 = sphi 0, %s130
    %s152 = sphi 0, %s154
    %s155 = sphi 0, %s152
    %s156 = sphi 0, %s155
    %s172 = sphi 0, %s156
    %s178 = sphi 0, %s180
    %s181 = sphi 0, %s178
    %s182 = sphi 0, %s181
    %s198 = sphi 0, %s182
  $region4: #{tpu_custom_call.1} parent=0 // loop_header_branch
    %15 = sbr.rel (%p13) target = $region8
  $region5: #{tpu_custom_call.1} parent=0 // loop_body
    %s17 = ssub.s32 %s12, 1
    %s18 = ssub.s32 %s12, 2
    %s19 = sadd.s32 %s12, 1
    %s20 = ssub.s32 %s12, %s19
    %p21 = scmp.eq.s32.totalorder %s20, 0
    %s23 = sadd.s32 %s22, 1
    %s24 = scalar_select %p21, %s22, %s23
    %p27 = pneg %p21
    %p28 = scmp.eq.s32.totalorder %s12, 1
    %p29 = por %p27, %p28
    %p30 = scmp.ne.s32.totalorder %s22, %s25
    %p31 = scmp.eq.s32.totalorder %s12, 0
    %p32 = por %p30, %p31
    %p33 = scmp.ne.s32.totalorder %s22, %s25
    %p34 = scmp.eq.s32.totalorder %s17, 1
    %p35 = por %p33, %p34
    %p36 = scmp.ne.s32.totalorder %s25, %s26
    %p37 = scmp.eq.s32.totalorder %s17, 0
    %p38 = por %p36, %p37
    %p39 = scmp.ne.s32.totalorder %s25, %s26
    %p40 = scmp.eq.s32.totalorder %s18, 1
    %p41 = por %p39, %p40
    %p43 = scmp.ne.s32.totalorder %s26, %s42
    %p44 = scmp.eq.s32.totalorder %s18, 0
    %p45 = por %p43, %p44
    %s46 = ssub.s32 %s12, %s19
    %p47 = scmp.eq.s32.totalorder %s46, 0
    %s49 = sadd.s32 %s48, 1
    %s50 = scalar_select %p47, %s48, %s49
    %p53 = pneg %p47
    %p54 = scmp.eq.s32.totalorder %s12, 1
    %p55 = por %p53, %p54
    %p56 = scmp.ne.s32.totalorder %s48, %s51
    %p57 = scmp.eq.s32.totalorder %s12, 0
    %p58 = por %p56, %p57
    %p59 = scmp.ne.s32.totalorder %s48, %s51
    %p60 = scmp.eq.s32.totalorder %s17, 1
    %p61 = por %p59, %p60
    %p62 = scmp.ne.s32.totalorder %s51, %s52
    %p63 = scmp.eq.s32.totalorder %s17, 0
    %p64 = por %p62, %p63
    %p65 = scmp.ne.s32.totalorder %s51, %s52
    %p66 = scmp.eq.s32.totalorder %s18, 1
    %p67 = por %p65, %p66
    %p69 = scmp.ne.s32.totalorder %s52, %s68
    %p70 = scmp.eq.s32.totalorder %s18, 0
    %p71 = por %p69, %p70
    %s72 = ssub.s32 %s12, %s19
    %p73 = scmp.eq.s32.totalorder %s72, 0
    %s75 = sadd.s32 %s74, 1
    %s76 = scalar_select %p73, %s74, %s75
    %p79 = pneg %p73
    %p80 = scmp.eq.s32.totalorder %s12, 1
    %p81 = por %p79, %p80
    %p82 = scmp.ne.s32.totalorder %s74, %s77
    %p83 = scmp.eq.s32.totalorder %s12, 0
    %p84 = por %p82, %p83
    %p85 = scmp.ne.s32.totalorder %s74, %s77
    %p86 = scmp.eq.s32.totalorder %s17, 1
    %p87 = por %p85, %p86
    %p88 = scmp.ne.s32.totalorder %s77, %s78
    %p89 = scmp.eq.s32.totalorder %s17, 0
    %p90 = por %p88, %p89
    %p91 = scmp.ne.s32.totalorder %s77, %s78
    %p92 = scmp.eq.s32.totalorder %s18, 1
    %p93 = por %p91, %p92
    %p95 = scmp.ne.s32.totalorder %s78, %s94
    %p96 = scmp.eq.s32.totalorder %s18, 0
    %p97 = por %p95, %p96
    %s98 = ssub.s32 %s12, %s19
    %p99 = scmp.eq.s32.totalorder %s98, 0
    %s101 = sadd.s32 %s100, 1
    %s102 = scalar_select %p99, %s100, %s101
    %p105 = pneg %p99
    %p106 = scmp.eq.s32.totalorder %s12, 1
    %p107 = por %p105, %p106
    %p108 = scmp.ne.s32.totalorder %s100, %s103
    %p109 = scmp.eq.s32.totalorder %s12, 0
    %p110 = por %p108, %p109
    %p111 = scmp.ne.s32.totalorder %s100, %s103
    %p112 = scmp.eq.s32.totalorder %s17, 1
    %p113 = por %p111, %p112
    %p114 = scmp.ne.s32.totalorder %s103, %s104
    %p115 = scmp.eq.s32.totalorder %s17, 0
    %p116 = por %p114, %p115
    %p117 = scmp.ne.s32.totalorder %s103, %s104
    %p118 = scmp.eq.s32.totalorder %s18, 1
    %p119 = por %p117, %p118
    %p121 = scmp.ne.s32.totalorder %s104, %s120
    %p122 = scmp.eq.s32.totalorder %s18, 0
    %p123 = por %p121, %p122
    %s124 = ssub.s32 %s12, %s19
    %p125 = scmp.eq.s32.totalorder %s124, 0
    %s127 = sadd.s32 %s126, 1
    %s128 = scalar_select %p125, %s126, %s127
    %p131 = pneg %p125
    %p132 = scmp.eq.s32.totalorder %s12, 1
    %p133 = por %p131, %p132
    %p134 = scmp.ne.s32.totalorder %s126, %s129
    %p135 = scmp.eq.s32.totalorder %s12, 0
    %p136 = por %p134, %p135
    %p137 = scmp.ne.s32.totalorder %s126, %s129
    %p138 = scmp.eq.s32.totalorder %s17, 1
    %p139 = por %p137, %p138
    %p140 = scmp.ne.s32.totalorder %s129, %s130
    %p141 = scmp.eq.s32.totalorder %s17, 0
    %p142 = por %p140, %p141
    %p143 = scmp.ne.s32.totalorder %s129, %s130
    %p144 = scmp.eq.s32.totalorder %s18, 1
    %p145 = por %p143, %p144
    %p147 = scmp.ne.s32.totalorder %s130, %s146
    %p148 = scmp.eq.s32.totalorder %s18, 0
    %p149 = por %p147, %p148
    %s150 = ssub.s32 %s12, %s19
    %p151 = scmp.eq.s32.totalorder %s150, 0
    %s153 = sadd.s32 %s152, 1
    %s154 = scalar_select %p151, %s152, %s153
    %p157 = pneg %p151
    %p158 = scmp.eq.s32.totalorder %s12, 1
    %p159 = por %p157, %p158
    %p160 = scmp.ne.s32.totalorder %s152, %s155
    %p161 = scmp.eq.s32.totalorder %s12, 0
    %p162 = por %p160, %p161
    %p163 = scmp.ne.s32.totalorder %s152, %s155
    %p164 = scmp.eq.s32.totalorder %s17, 1
    %p165 = por %p163, %p164
    %p166 = scmp.ne.s32.totalorder %s155, %s156
    %p167 = scmp.eq.s32.totalorder %s17, 0
    %p168 = por %p166, %p167
    %p169 = scmp.ne.s32.totalorder %s155, %s156
    %p170 = scmp.eq.s32.totalorder %s18, 1
    %p171 = por %p169, %p170
    %p173 = scmp.ne.s32.totalorder %s156, %s172
    %p174 = scmp.eq.s32.totalorder %s18, 0
    %p175 = por %p173, %p174
    %s176 = ssub.s32 %s12, %s19
    %p177 = scmp.eq.s32.totalorder %s176, 0
    %s179 = sadd.s32 %s178, 1
    %s180 = scalar_select %p177, %s178, %s179
    %p183 = pneg %p177
    %p184 = scmp.eq.s32.totalorder %s12, 1
    %p185 = por %p183, %p184
    %p186 = scmp.ne.s32.totalorder %s178, %s181
    %p187 = scmp.eq.s32.totalorder %s12, 0
    %p188 = por %p186, %p187
    %p189 = scmp.ne.s32.totalorder %s178, %s181
    %p190 = scmp.eq.s32.totalorder %s17, 1
    %p191 = por %p189, %p190
    %p192 = scmp.ne.s32.totalorder %s181, %s182
    %p193 = scmp.eq.s32.totalorder %s17, 0
    %p194 = por %p192, %p193
    %p195 = scmp.ne.s32.totalorder %s181, %s182
    %p196 = scmp.eq.s32.totalorder %s18, 1
    %p197 = por %p195, %p196
    %p199 = scmp.ne.s32.totalorder %s182, %s198
    %p200 = scmp.eq.s32.totalorder %s18, 0
    %p201 = por %p199, %p200
    %p202 = scmp.le.s32.totalorder 1, %s12
    %p203 = scmp.lt.s32.totalorder %s12, 3
    %p204 = pnand %p202, %p203
    %p205 = pneg %p204
    // Predicated region
    $region9: #{tpu_custom_call.1} parent=5 // pred_check
      _
    $region10: #{tpu_custom_call.1} parent=5 // pred_check_branch
      %207 = sbr.rel (%p204) target = $region12
    $region11: #{tpu_custom_call.1} parent=5 // pred_region
      %s208 = ssub.s32 %s12, 1
    $region12: #{tpu_custom_call.1} parent=5 // pred_fallthru
      _
    %p209 = scmp.lt.s32.totalorder %s12, 2
    // Predicated region
    $region13: #{tpu_custom_call.1} parent=5 // pred_check
      %p210 = pneg %p209
    $region14: #{tpu_custom_call.1} parent=5 // pred_check_branch
      %212 = sbr.rel (%p210) target = $region16
    $region15: #{tpu_custom_call.1} parent=5 // pred_region
      // Predicated region
      $region17: #{tpu_custom_call.1} parent=15 // pred_check
        %p213 = pneg %p32
      $region18: #{tpu_custom_call.1} parent=15 // pred_check_branch
        %215 = sbr.rel (%p213) target = $region20
      $region19: #{tpu_custom_call.1} parent=15 // pred_region
        %p216 = scmp.lt.s32.totalorder %s12, 1
        %s217 = scalar_select %p216, %s12, 1
        %s218 = smul.addr %s217, 30
        %s219 = smul.addr %s218, 8
        %s220 = scalar_lea.vmem %s0, %s219
      $region20: #{tpu_custom_call.1} parent=15 // pred_fallthru
        _
      // Predicated region
      $region21: #{tpu_custom_call.1} parent=15 // pred_check
        %p221 = pneg %p58
      $region22: #{tpu_custom_call.1} parent=15 // pred_check_branch
        %223 = sbr.rel (%p221) target = $region24
      $region23: #{tpu_custom_call.1} parent=15 // pred_region
        %p224 = scmp.lt.s32.totalorder %s12, 1
        %s225 = scalar_select %p224, %s12, 1
        %s226 = smul.addr %s225, 30
        %s227 = smul.addr %s226, 8
        %s228 = scalar_lea.vmem %s1, %s227
      $region24: #{tpu_custom_call.1} parent=15 // pred_fallthru
        _
      // Predicated region
      $region25: #{tpu_custom_call.1} parent=15 // pred_check
        %p229 = pneg %p84
      $region26: #{tpu_custom_call.1} parent=15 // pred_check_branch
        %231 = sbr.rel (%p229) target = $region28
      $region27: #{tpu_custom_call.1} parent=15 // pred_region
        %p232 = scmp.lt.s32.totalorder %s12, 1
        %s233 = scalar_select %p232, %s12, 1
        %s234 = smul.addr %s233, 2
        %s235 = smul.addr %s234, 4
        %s236 = scalar_lea.vmem %s2, %s235
      $region28: #{tpu_custom_call.1} parent=15 // pred_fallthru
        _
      // Predicated region
      $region29: #{tpu_custom_call.1} parent=15 // pred_check
        %p237 = pneg %p110
      $region30: #{tpu_custom_call.1} parent=15 // pred_check_branch
        %239 = sbr.rel (%p237) target = $region32
      $region31: #{tpu_custom_call.1} parent=15 // pred_region
        %p240 = scmp.lt.s32.totalorder %s12, 1
        %s241 = scalar_select %p240, %s12, 1
        %s242 = smul.addr %s241, 2
        %s243 = smul.addr %s242, 4
        %s244 = scalar_lea.vmem %s3, %s243
      $region32: #{tpu_custom_call.1} parent=15 // pred_fallthru
        _
      // Predicated region
      $region33: #{tpu_custom_call.1} parent=15 // pred_check
        %p245 = pneg %p136
      $region34: #{tpu_custom_call.1} parent=15 // pred_check_branch
        %247 = sbr.rel (%p245) target = $region36
      $region35: #{tpu_custom_call.1} parent=15 // pred_region
        %p248 = scmp.lt.s32.totalorder %s12, 1
        %s249 = scalar_select %p248, %s12, 1
        %s250 = smul.addr %s249, 12
        %s251 = scalar_lea.vmem %s4, %s250
      $region36: #{tpu_custom_call.1} parent=15 // pred_fallthru
        _
      // Predicated region
      $region37: #{tpu_custom_call.1} parent=15 // pred_check
        %p252 = pneg %p162
      $region38: #{tpu_custom_call.1} parent=15 // pred_check_branch
        %254 = sbr.rel (%p252) target = $region40
      $region39: #{tpu_custom_call.1} parent=15 // pred_region
        %p255 = scmp.lt.s32.totalorder %s12, 1
        %s256 = scalar_select %p255, %s12, 1
        %s257 = smul.addr %s256, 12
        %s258 = scalar_lea.vmem %s5, %s257
      $region40: #{tpu_custom_call.1} parent=15 // pred_fallthru
        _
    $region16: #{tpu_custom_call.1} parent=5 // pred_fallthru
      _
    %p259 = scmp.le.s32.totalorder 1, %s12
    %p260 = scmp.lt.s32.totalorder %s12, 3
    %p261 = pnand %p259, %p260
    %p262 = pneg %p261
    // Predicated region
    $region41: #{tpu_custom_call.1} parent=5 // pred_check
      _
    $region42: #{tpu_custom_call.1} parent=5 // pred_check_branch
      %264 = sbr.rel (%p261) target = $region44
    $region43: #{tpu_custom_call.1} parent=5 // pred_region
      %s265 = ssub.s32 %s12, 1
      %p266 = scmp.lt.s32.totalorder %s17, 1
      %s267 = scalar_select %p266, %s17, 1
      %s268 = smul.addr %s267, 30
      %s269 = smul.addr %s268, 8
      %s270 = scalar_lea.vmem %s0, %s269
      %p271 = pneg %p38
      %p272 = pneg %p35
      %p273 = scmp.lt.s32.totalorder %s17, 1
      %s274 = scalar_select %p273, %s17, 1
      %s275 = smul.addr %s274, 30
      %s276 = smul.addr %s275, 8
      %s277 = scalar_lea.vmem %s1, %s276
      %p278 = pneg %p64
      %p279 = pneg %p61
      %p280 = scmp.lt.s32.totalorder %s17, 1
      %s281 = scalar_select %p280, %s17, 1
      %s282 = smul.addr %s281, 2
      %s283 = smul.addr %s282, 4
      %s284 = scalar_lea.vmem %s2, %s283
      %p285 = pneg %p90
      %p286 = pneg %p87
      %p287 = scmp.lt.s32.totalorder %s17, 1
      %s288 = scalar_select %p287, %s17, 1
      %s289 = smul.addr %s288, 2
      %s290 = smul.addr %s289, 4
      %s291 = scalar_lea.vmem %s3, %s290
      %p292 = pneg %p116
      %p293 = pneg %p113
      %p294 = scmp.lt.s32.totalorder %s17, 1
      %s295 = scalar_select %p294, %s17, 1
      %s296 = smul.addr %s295, 12
      %s297 = scalar_lea.vmem %s4, %s296
      %p298 = pneg %p142
      %p299 = pneg %p139
      %p300 = scmp.lt.s32.totalorder %s17, 1
      %s301 = scalar_select %p300, %s17, 1
      %s302 = smul.addr %s301, 12
      %s303 = scalar_lea.vmem %s5, %s302
      %p304 = pneg %p168
      %p305 = pneg %p165
      %p306 = pneg %p194
      %p307 = pneg %p191
      %p308 = scmp.lt.s32.totalorder %s17, 1
      %s309 = scalar_select %p308, %s17, 1
      %s310 = scalar_lea.vmem %s6, %s309
      %p311 = scmp.lt.s32.totalorder %s17, 1
      %s312 = scalar_select %p311, %s17, 1
      %s313 = smul.addr %s312, 30
      %s314 = smul.addr %s313, 8
      %s315 = scalar_lea.vmem %s0, %s314
      %p316 = scmp.lt.s32.totalorder %s17, 1
      %s317 = scalar_select %p316, %s17, 1
      %s318 = smul.addr %s317, 30
      %s319 = smul.addr %s318, 8
      %s320 = scalar_lea.vmem %s1, %s319
      %p321 = scmp.lt.s32.totalorder %s17, 1
      %s322 = scalar_select %p321, %s17, 1
      %s323 = smul.addr %s322, 2
      %s324 = smul.addr %s323, 4
      %s325 = scalar_lea.vmem %s2, %s324
      %p326 = scmp.lt.s32.totalorder %s17, 1
      %s327 = scalar_select %p326, %s17, 1
      %s328 = smul.addr %s327, 2
      %s329 = smul.addr %s328, 4
      %s330 = scalar_lea.vmem %s3, %s329
      %p331 = scmp.lt.s32.totalorder %s17, 1
      %s332 = scalar_select %p331, %s17, 1
      %s333 = smul.addr %s332, 12
      %s334 = scalar_lea.vmem %s4, %s333
      %p335 = scmp.lt.s32.totalorder %s17, 1
      %s336 = scalar_select %p335, %s17, 1
      %s337 = smul.addr %s336, 12
      %s338 = scalar_lea.vmem %s5, %s337
      %p339 = scmp.lt.s32.totalorder %s17, 1
      %s340 = scalar_select %p339, %s17, 1
      %s341 = scalar_lea.vmem %s6, %s340
      %v342 = vld [vmem:[%s325] sm:$0x77]
      %v343 = vld [vmem:[%s330] sm:$0x77]
      %v344 = vld [vmem:[%s315] sm:$0xff]
      %v345 = vld [vmem:[%s315 + $0x8] sm:$0xff]
      %v346 = vld [vmem:[%s315 + $0x10] sm:$0xff]
      %v347 = vld [vmem:[%s315 + $0x18] sm:$0xff]
      %v348 = vld [vmem:[%s315 + $0x20] sm:$0xff]
      %v349 = vld [vmem:[%s320] sm:$0xff]
      %v350 = vld [vmem:[%s320 + $0x8] sm:$0xff]
      %v351 = vld [vmem:[%s320 + $0x10] sm:$0xff]
      %v352 = vld [vmem:[%s320 + $0x18] sm:$0xff]
      %v353 = vld [vmem:[%s320 + $0x20] sm:$0xff]
      %v354 = vld [vmem:[%s334] sm:$0x3]
      %v355 = vld [vmem:[%s338] sm:$0x3]
      %357 = vset.pattern.permute.xlu0 0
      %358 = vperm.xlu0 %357, %v344
      %v359 = vpop.permute.xlu0 %358
      %362 = vset.pattern.permute.xlu0 0
      %363 = vperm.xlu0 %362, %v345
      %v364 = vpop.permute.xlu0 %363
      %367 = vset.pattern.permute.xlu0 0
      %368 = vperm.xlu0 %367, %v346
      %v369 = vpop.permute.xlu0 %368
      %372 = vset.pattern.permute.xlu0 0
      %373 = vperm.xlu0 %372, %v347
      %v374 = vpop.permute.xlu0 %373
      %377 = vset.pattern.permute.xlu0 0
      %378 = vperm.xlu0 %377, %v348
      %v379 = vpop.permute.xlu0 %378
      %v382 = vlaneseq
      %v383 = vshrl.u32 %v382, 7
      %v384 = vsub.s32 0, %v383
      %v385 = vrot.slane %v343, %v384
      %v386 = vlaneseq
      %v387 = vshrl.u32 %v386, 7
      %v388 = vsub.s32 4, %v387
      %v389 = vrot.slane %v343, %v388
      %v392 = vlaneseq
      %v393 = vshrl.u32 %v392, 7
      %v394 = vsub.s32 0, %v393
      %v395 = vrot.slane %v385, %v394
      %v396 = vlaneseq
      %v397 = vshrl.u32 %v396, 7
      %v398 = vsub.s32 0, %v397
      %v399 = vrot.slane %v389, %v398
      %v400 = vsub.f32 %v359, %v395
      %v401 = vsub.f32 %v359, %v399
      %v402 = vsub.f32 %v364, %v395
      %v403 = vsub.f32 %v364, %v399
      %v404 = vsub.f32 %v369, %v395
      %v405 = vsub.f32 %v369, %v399
      %v406 = vsub.f32 %v374, %v395
      %v407 = vsub.f32 %v374, %v399
      %v408 = vsub.f32 %v379, %v395
      %v409 = vsub.f32 %v379, %v399
      %v410 = vmul.f32 %v400, %v400
      %v411 = vmul.f32 %v401, %v401
      %v412 = vmul.f32 %v402, %v402
      %v413 = vmul.f32 %v403, %v403
      %v414 = vmul.f32 %v404, %v404
      %v415 = vmul.f32 %v405, %v405
      %v416 = vmul.f32 %v406, %v406
      %v417 = vmul.f32 %v407, %v407
      %v418 = vmul.f32 %v408, %v408
      %v419 = vmul.f32 %v409, %v409
      %420 = vset.pattern.permute.xlu0 1
      %421 = vperm.xlu0 %420, %v344
      %v422 = vpop.permute.xlu0 %421
      %424 = vset.pattern.permute.xlu0 1
      %425 = vperm.xlu0 %424, %v345
      %v426 = vpop.permute.xlu0 %425
      %428 = vset.pattern.permute.xlu0 1
      %429 = vperm.xlu0 %428, %v346
      %v430 = vpop.permute.xlu0 %429
      %432 = vset.pattern.permute.xlu0 1
      %433 = vperm.xlu0 %432, %v347
      %v434 = vpop.permute.xlu0 %433
      %436 = vset.pattern.permute.xlu0 1
      %437 = vperm.xlu0 %436, %v348
      %v438 = vpop.permute.xlu0 %437
      %v440 = vlaneseq
      %v441 = vshrl.u32 %v440, 7
      %v442 = vsub.s32 1, %v441
      %v443 = vrot.slane %v343, %v442
      %v444 = vlaneseq
      %v445 = vshrl.u32 %v444, 7
      %v446 = vsub.s32 5, %v445
      %v447 = vrot.slane %v343, %v446
      %v450 = vlaneseq
      %v451 = vshrl.u32 %v450, 7
      %v452 = vsub.s32 1, %v451
      %v453 = vrot.slane %v443, %v452
      %v454 = vlaneseq
      %v455 = vshrl.u32 %v454, 7
      %v456 = vsub.s32 1, %v455
      %v457 = vrot.slane %v447, %v456
      %v458 = vsub.f32 %v422, %v453
      %v459 = vsub.f32 %v422, %v457
      %v460 = vsub.f32 %v426, %v453
      %v461 = vsub.f32 %v426, %v457
      %v462 = vsub.f32 %v430, %v453
      %v463 = vsub.f32 %v430, %v457
      %v464 = vsub.f32 %v434, %v453
      %v465 = vsub.f32 %v434, %v457
      %v466 = vsub.f32 %v438, %v453
      %v467 = vsub.f32 %v438, %v457
      %v468 = vmul.f32 %v458, %v458
      %v469 = vmul.f32 %v459, %v459
      %v470 = vmul.f32 %v460, %v460
      %v471 = vmul.f32 %v461, %v461
      %v472 = vmul.f32 %v462, %v462
      %v473 = vmul.f32 %v463, %v463
      %v474 = vmul.f32 %v464, %v464
      %v475 = vmul.f32 %v465, %v465
      %v476 = vmul.f32 %v466, %v466
      %v477 = vmul.f32 %v467, %v467
      %v478 = vadd.f32 %v410, %v468
      %v479 = vadd.f32 %v411, %v469
      %v480 = vadd.f32 %v412, %v470
      %v481 = vadd.f32 %v413, %v471
      %v482 = vadd.f32 %v414, %v472
      %v483 = vadd.f32 %v415, %v473
      %v484 = vadd.f32 %v416, %v474
      %v485 = vadd.f32 %v417, %v475
      %v486 = vadd.f32 %v418, %v476
      %v487 = vadd.f32 %v419, %v477
      %488 = vset.pattern.permute.xlu0 2
      %489 = vperm.xlu0 %488, %v344
      %v490 = vpop.permute.xlu0 %489
      %492 = vset.pattern.permute.xlu0 2
      %493 = vperm.xlu0 %492, %v345
      %v494 = vpop.permute.xlu0 %493
      %496 = vset.pattern.permute.xlu0 2
      %497 = vperm.xlu0 %496, %v346
      %v498 = vpop.permute.xlu0 %497
      %500 = vset.pattern.permute.xlu0 2
      %501 = vperm.xlu0 %500, %v347
      %v502 = vpop.permute.xlu0 %501
      %504 = vset.pattern.permute.xlu0 2
      %505 = vperm.xlu0 %504, %v348
      %v506 = vpop.permute.xlu0 %505
      %v508 = vlaneseq
      %v509 = vshrl.u32 %v508, 7
      %v510 = vsub.s32 2, %v509
      %v511 = vrot.slane %v343, %v510
      %v512 = vlaneseq
      %v513 = vshrl.u32 %v512, 7
      %v514 = vsub.s32 6, %v513
      %v515 = vrot.slane %v343, %v514
      %v518 = vlaneseq
      %v519 = vshrl.u32 %v518, 7
      %v520 = vsub.s32 2, %v519
      %v521 = vrot.slane %v511, %v520
      %v522 = vlaneseq
      %v523 = vshrl.u32 %v522, 7
      %v524 = vsub.s32 2, %v523
      %v525 = vrot.slane %v515, %v524
      %v526 = vsub.f32 %v490, %v521
      %v527 = vsub.f32 %v490, %v525
      %v528 = vsub.f32 %v494, %v521
      %v529 = vsub.f32 %v494, %v525
      %v530 = vsub.f32 %v498, %v521
      %v531 = vsub.f32 %v498, %v525
      %v532 = vsub.f32 %v502, %v521
      %v533 = vsub.f32 %v502, %v525
      %v534 = vsub.f32 %v506, %v521
      %v535 = vsub.f32 %v506, %v525
      %v536 = vmul.f32 %v526, %v526
      %v537 = vmul.f32 %v527, %v527
      %v538 = vmul.f32 %v528, %v528
      %v539 = vmul.f32 %v529, %v529
      %v540 = vmul.f32 %v530, %v530
      %v541 = vmul.f32 %v531, %v531
      %v542 = vmul.f32 %v532, %v532
      %v543 = vmul.f32 %v533, %v533
      %v544 = vmul.f32 %v534, %v534
      %v545 = vmul.f32 %v535, %v535
      %v546 = vadd.f32 %v478, %v536
      %v547 = vadd.f32 %v479, %v537
      %v548 = vadd.f32 %v480, %v538
      %v549 = vadd.f32 %v481, %v539
      %v550 = vadd.f32 %v482, %v540
      %v551 = vadd.f32 %v483, %v541
      %v552 = vadd.f32 %v484, %v542
      %v553 = vadd.f32 %v485, %v543
      %v554 = vadd.f32 %v486, %v544
      %v555 = vadd.f32 %v487, %v545
      %557 = vset.pattern.permute.xlu0 0
      %558 = vperm.xlu0 %557, %v349
      %v559 = vpop.permute.xlu0 %558
      %562 = vset.pattern.permute.xlu0 0
      %563 = vperm.xlu0 %562, %v350
      %v564 = vpop.permute.xlu0 %563
      %567 = vset.pattern.permute.xlu0 0
      %568 = vperm.xlu0 %567, %v351
      %v569 = vpop.permute.xlu0 %568
      %572 = vset.pattern.permute.xlu0 0
      %573 = vperm.xlu0 %572, %v352
      %v574 = vpop.permute.xlu0 %573
      %577 = vset.pattern.permute.xlu0 0
      %578 = vperm.xlu0 %577, %v353
      %v579 = vpop.permute.xlu0 %578
      %v582 = vlaneseq
      %v583 = vshrl.u32 %v582, 7
      %v584 = vsub.s32 0, %v583
      %v585 = vrot.slane %v342, %v584
      %v586 = vlaneseq
      %v587 = vshrl.u32 %v586, 7
      %v588 = vsub.s32 4, %v587
      %v589 = vrot.slane %v342, %v588
      %v592 = vlaneseq
      %v593 = vshrl.u32 %v592, 7
      %v594 = vsub.s32 0, %v593
      %v595 = vrot.slane %v585, %v594
      %v596 = vlaneseq
      %v597 = vshrl.u32 %v596, 7
      %v598 = vsub.s32 0, %v597
      %v599 = vrot.slane %v589, %v598
      %v600 = vsub.f32 %v559, %v595
      %v601 = vsub.f32 %v559, %v599
      %v602 = vsub.f32 %v564, %v595
      %v603 = vsub.f32 %v564, %v599
      %v604 = vsub.f32 %v569, %v595
      %v605 = vsub.f32 %v569, %v599
      %v606 = vsub.f32 %v574, %v595
      %v607 = vsub.f32 %v574, %v599
      %v608 = vsub.f32 %v579, %v595
      %v609 = vsub.f32 %v579, %v599
      %v610 = vmul.f32 %v600, %v600
      %v611 = vmul.f32 %v601, %v601
      %v612 = vmul.f32 %v602, %v602
      %v613 = vmul.f32 %v603, %v603
      %v614 = vmul.f32 %v604, %v604
      %v615 = vmul.f32 %v605, %v605
      %v616 = vmul.f32 %v606, %v606
      %v617 = vmul.f32 %v607, %v607
      %v618 = vmul.f32 %v608, %v608
      %v619 = vmul.f32 %v609, %v609
      %620 = vset.pattern.permute.xlu0 1
      %621 = vperm.xlu0 %620, %v349
      %v622 = vpop.permute.xlu0 %621
      %624 = vset.pattern.permute.xlu0 1
      %625 = vperm.xlu0 %624, %v350
      %v626 = vpop.permute.xlu0 %625
      %628 = vset.pattern.permute.xlu0 1
      %629 = vperm.xlu0 %628, %v351
      %v630 = vpop.permute.xlu0 %629
      %632 = vset.pattern.permute.xlu0 1
      %633 = vperm.xlu0 %632, %v352
      %v634 = vpop.permute.xlu0 %633
      %636 = vset.pattern.permute.xlu0 1
      %637 = vperm.xlu0 %636, %v353
      %v638 = vpop.permute.xlu0 %637
      %v640 = vlaneseq
      %v641 = vshrl.u32 %v640, 7
      %v642 = vsub.s32 1, %v641
      %v643 = vrot.slane %v342, %v642
      %v644 = vlaneseq
      %v645 = vshrl.u32 %v644, 7
      %v646 = vsub.s32 5, %v645
      %v647 = vrot.slane %v342, %v646
      %v650 = vlaneseq
      %v651 = vshrl.u32 %v650, 7
      %v652 = vsub.s32 1, %v651
      %v653 = vrot.slane %v643, %v652
      %v654 = vlaneseq
      %v655 = vshrl.u32 %v654, 7
      %v656 = vsub.s32 1, %v655
      %v657 = vrot.slane %v647, %v656
      %v658 = vsub.f32 %v622, %v653
      %v659 = vsub.f32 %v622, %v657
      %v660 = vsub.f32 %v626, %v653
      %v661 = vsub.f32 %v626, %v657
      %v662 = vsub.f32 %v630, %v653
      %v663 = vsub.f32 %v630, %v657
      %v664 = vsub.f32 %v634, %v653
      %v665 = vsub.f32 %v634, %v657
      %v666 = vsub.f32 %v638, %v653
      %v667 = vsub.f32 %v638, %v657
      %v668 = vmul.f32 %v658, %v658
      %v669 = vmul.f32 %v659, %v659
      %v670 = vmul.f32 %v660, %v660
      %v671 = vmul.f32 %v661, %v661
      %v672 = vmul.f32 %v662, %v662
      %v673 = vmul.f32 %v663, %v663
      %v674 = vmul.f32 %v664, %v664
      %v675 = vmul.f32 %v665, %v665
      %v676 = vmul.f32 %v666, %v666
      %v677 = vmul.f32 %v667, %v667
      %v678 = vadd.f32 %v610, %v668
      %v679 = vadd.f32 %v611, %v669
      %v680 = vadd.f32 %v612, %v670
      %v681 = vadd.f32 %v613, %v671
      %v682 = vadd.f32 %v614, %v672
      %v683 = vadd.f32 %v615, %v673
      %v684 = vadd.f32 %v616, %v674
      %v685 = vadd.f32 %v617, %v675
      %v686 = vadd.f32 %v618, %v676
      %v687 = vadd.f32 %v619, %v677
      %688 = vset.pattern.permute.xlu0 2
      %689 = vperm.xlu0 %688, %v349
      %v690 = vpop.permute.xlu0 %689
      %692 = vset.pattern.permute.xlu0 2
      %693 = vperm.xlu0 %692, %v350
      %v694 = vpop.permute.xlu0 %693
      %696 = vset.pattern.permute.xlu0 2
      %697 = vperm.xlu0 %696, %v351
      %v698 = vpop.permute.xlu0 %697
      %700 = vset.pattern.permute.xlu0 2
      %701 = vperm.xlu0 %700, %v352
      %v702 = vpop.permute.xlu0 %701
      %704 = vset.pattern.permute.xlu0 2
      %705 = vperm.xlu0 %704, %v353
      %v706 = vpop.permute.xlu0 %705
      %v708 = vlaneseq
      %v709 = vshrl.u32 %v708, 7
      %v710 = vsub.s32 2, %v709
      %v711 = vrot.slane %v342, %v710
      %v712 = vlaneseq
      %v713 = vshrl.u32 %v712, 7
      %v714 = vsub.s32 6, %v713
      %v715 = vrot.slane %v342, %v714
      %v718 = vlaneseq
      %v719 = vshrl.u32 %v718, 7
      %v720 = vsub.s32 2, %v719
      %v721 = vrot.slane %v711, %v720
      %v722 = vlaneseq
      %v723 = vshrl.u32 %v722, 7
      %v724 = vsub.s32 2, %v723
      %v725 = vrot.slane %v715, %v724
      %v726 = vsub.f32 %v690, %v721
      %v727 = vsub.f32 %v690, %v725
      %v728 = vsub.f32 %v694, %v721
      %v729 = vsub.f32 %v694, %v725
      %v730 = vsub.f32 %v698, %v721
      %v731 = vsub.f32 %v698, %v725
      %v732 = vsub.f32 %v702, %v721
      %v733 = vsub.f32 %v702, %v725
      %v734 = vsub.f32 %v706, %v721
      %v735 = vsub.f32 %v706, %v725
      %v736 = vmul.f32 %v726, %v726
      %v737 = vmul.f32 %v727, %v727
      %v738 = vmul.f32 %v728, %v728
      %v739 = vmul.f32 %v729, %v729
      %v740 = vmul.f32 %v730, %v730
      %v741 = vmul.f32 %v731, %v731
      %v742 = vmul.f32 %v732, %v732
      %v743 = vmul.f32 %v733, %v733
      %v744 = vmul.f32 %v734, %v734
      %v745 = vmul.f32 %v735, %v735
      %v746 = vadd.f32 %v678, %v736
      %v747 = vadd.f32 %v679, %v737
      %v748 = vadd.f32 %v680, %v738
      %v749 = vadd.f32 %v681, %v739
      %v750 = vadd.f32 %v682, %v740
      %v751 = vadd.f32 %v683, %v741
      %v752 = vadd.f32 %v684, %v742
      %v753 = vadd.f32 %v685, %v743
      %v754 = vadd.f32 %v686, %v744
      %v755 = vadd.f32 %v687, %v745
      %v756 = vmin.f32 %v546, %v550
      %v757 = vmin.f32 %v548, %v552
      %v758 = vmin.f32 %v756, %v554
      %v759 = vmin.f32 %v758, %v757
      %v760 = vrot.slane %v759, 4
      %v761 = vmin.f32 %v759, %v760
      %v762 = vrot.slane %v761, 2
      %v763 = vmin.f32 %v761, %v762
      %v764 = vrot.slane %v763, 1
      %v765 = vmin.f32 %v763, %v764
      %vm766 = vcmask 916480
      %v767 = vsel %vm766, %v547, inf
      %v768 = vsel %vm766, %v549, inf
      %v769 = vsel %vm766, %v551, inf
      %v770 = vmin.f32 %v767, %v769
      %v771 = vsel %vm766, %v553, inf
      %v772 = vmin.f32 %v768, %v771
      %v773 = vsel %vm766, %v555, inf
      %v774 = vmin.f32 %v770, %v773
      %v775 = vmin.f32 %v774, %v772
      %v776 = vrot.slane %v775, 4
      %v777 = vmin.f32 %v775, %v776
      %v778 = vrot.slane %v777, 2
      %v779 = vmin.f32 %v777, %v778
      %v780 = vrot.slane %v779, 1
      %v781 = vmin.f32 %v779, %v780
      %v782 = vmin.f32 %v746, %v750
      %v783 = vmin.f32 %v748, %v752
      %v784 = vmin.f32 %v782, %v754
      %v785 = vmin.f32 %v784, %v783
      %v786 = vrot.slane %v785, 4
      %v787 = vmin.f32 %v785, %v786
      %v788 = vrot.slane %v787, 2
      %v789 = vmin.f32 %v787, %v788
      %v790 = vrot.slane %v789, 1
      %v791 = vmin.f32 %v789, %v790
      %v792 = vsel %vm766, %v747, inf
      %v793 = vsel %vm766, %v749, inf
      %v794 = vsel %vm766, %v751, inf
      %v795 = vmin.f32 %v792, %v794
      %v796 = vsel %vm766, %v753, inf
      %v797 = vmin.f32 %v793, %v796
      %v798 = vsel %vm766, %v755, inf
      %v799 = vmin.f32 %v795, %v798
      %v800 = vmin.f32 %v799, %v797
      %v801 = vrot.slane %v800, 4
      %v802 = vmin.f32 %v800, %v801
      %v803 = vrot.slane %v802, 2
      %v804 = vmin.f32 %v802, %v803
      %v805 = vrot.slane %v804, 1
      %v806 = vmin.f32 %v804, %v805
      %v808 = vlaneseq
      %v809 = vshrl.u32 %v808, 7
      %v810 = vsub.s32 0, %v809
      %v811 = vrot.slane %v354, %v810
      %v812 = vlaneseq
      %v813 = vshrl.u32 %v812, 7
      %v814 = vsub.s32 1, %v813
      %v815 = vrot.slane %v354, %v814
      %v818 = vmul.f32 %v765, %v811
      %v819 = vmul.f32 %v781, %v815
      %v820 = vadd.f32 %v818, 0.0
      %v821 = vadd.f32 %v819, 0.0
      %v823 = vlaneseq
      %v824 = vshrl.u32 %v823, 7
      %v825 = vsub.s32 0, %v824
      %v826 = vrot.slane %v355, %v825
      %v827 = vlaneseq
      %v828 = vshrl.u32 %v827, 7
      %v829 = vsub.s32 1, %v828
      %v830 = vrot.slane %v355, %v829
      %v833 = vmul.f32 %v791, %v826
      %v834 = vmul.f32 %v806, %v830
      %v835 = vadd.f32 %v820, %v833
      %v836 = vadd.f32 %v821, %v834
      %s837 = scalar_lea.vmem %s315, 40
      %v838 = vld [vmem:[%s837] sm:$0xff]
      %v839 = vld [vmem:[%s837 + $0x8] sm:$0xff]
      %v840 = vld [vmem:[%s837 + $0x10] sm:$0xff]
      %v841 = vld [vmem:[%s837 + $0x18] sm:$0xff]
      %v842 = vld [vmem:[%s837 + $0x20] sm:$0xff]
      %s843 = scalar_lea.vmem %s320, 40
      %v844 = vld [vmem:[%s843] sm:$0xff]
      %v845 = vld [vmem:[%s843 + $0x8] sm:$0xff]
      %v846 = vld [vmem:[%s843 + $0x10] sm:$0xff]
      %v847 = vld [vmem:[%s843 + $0x18] sm:$0xff]
      %v848 = vld [vmem:[%s843 + $0x20] sm:$0xff]
      %s849 = scalar_lea.vmem %s334, 2
      %v850 = vld [vmem:[%s849] sm:$0x3]
      %s851 = scalar_lea.vmem %s338, 2
      %v852 = vld [vmem:[%s851] sm:$0x3]
      %854 = vset.pattern.permute.xlu0 0
      %855 = vperm.xlu0 %854, %v838
      %v856 = vpop.permute.xlu0 %855
      %859 = vset.pattern.permute.xlu0 0
      %860 = vperm.xlu0 %859, %v839
      %v861 = vpop.permute.xlu0 %860
      %864 = vset.pattern.permute.xlu0 0
      %865 = vperm.xlu0 %864, %v840
      %v866 = vpop.permute.xlu0 %865
      %869 = vset.pattern.permute.xlu0 0
      %870 = vperm.xlu0 %869, %v841
      %v871 = vpop.permute.xlu0 %870
      %874 = vset.pattern.permute.xlu0 0
      %875 = vperm.xlu0 %874, %v842
      %v876 = vpop.permute.xlu0 %875
      %v878 = vsub.f32 %v856, %v395
      %v879 = vsub.f32 %v856, %v399
      %v880 = vsub.f32 %v861, %v395
      %v881 = vsub.f32 %v861, %v399
      %v882 = vsub.f32 %v866, %v395
      %v883 = vsub.f32 %v866, %v399
      %v884 = vsub.f32 %v871, %v395
      %v885 = vsub.f32 %v871, %v399
      %v886 = vsub.f32 %v876, %v395
      %v887 = vsub.f32 %v876, %v399
      %v888 = vmul.f32 %v878, %v878
      %v889 = vmul.f32 %v879, %v879
      %v890 = vmul.f32 %v880, %v880
      %v891 = vmul.f32 %v881, %v881
      %v892 = vmul.f32 %v882, %v882
      %v893 = vmul.f32 %v883, %v883
      %v894 = vmul.f32 %v884, %v884
      %v895 = vmul.f32 %v885, %v885
      %v896 = vmul.f32 %v886, %v886
      %v897 = vmul.f32 %v887, %v887
      %898 = vset.pattern.permute.xlu0 1
      %899 = vperm.xlu0 %898, %v838
      %v900 = vpop.permute.xlu0 %899
      %902 = vset.pattern.permute.xlu0 1
      %903 = vperm.xlu0 %902, %v839
      %v904 = vpop.permute.xlu0 %903
      %906 = vset.pattern.permute.xlu0 1
      %907 = vperm.xlu0 %906, %v840
      %v908 = vpop.permute.xlu0 %907
      %910 = vset.pattern.permute.xlu0 1
      %911 = vperm.xlu0 %910, %v841
      %v912 = vpop.permute.xlu0 %911
      %914 = vset.pattern.permute.xlu0 1
      %915 = vperm.xlu0 %914, %v842
      %v916 = vpop.permute.xlu0 %915
      %v918 = vsub.f32 %v900, %v453
      %v919 = vsub.f32 %v900, %v457
      %v920 = vsub.f32 %v904, %v453
      %v921 = vsub.f32 %v904, %v457
      %v922 = vsub.f32 %v908, %v453
      %v923 = vsub.f32 %v908, %v457
      %v924 = vsub.f32 %v912, %v453
      %v925 = vsub.f32 %v912, %v457
      %v926 = vsub.f32 %v916, %v453
      %v927 = vsub.f32 %v916, %v457
      %v928 = vmul.f32 %v918, %v918
      %v929 = vmul.f32 %v919, %v919
      %v930 = vmul.f32 %v920, %v920
      %v931 = vmul.f32 %v921, %v921
      %v932 = vmul.f32 %v922, %v922
      %v933 = vmul.f32 %v923, %v923
      %v934 = vmul.f32 %v924, %v924
      %v935 = vmul.f32 %v925, %v925
      %v936 = vmul.f32 %v926, %v926
      %v937 = vmul.f32 %v927, %v927
      %v938 = vadd.f32 %v888, %v928
      %v939 = vadd.f32 %v889, %v929
      %v940 = vadd.f32 %v890, %v930
      %v941 = vadd.f32 %v891, %v931
      %v942 = vadd.f32 %v892, %v932
      %v943 = vadd.f32 %v893, %v933
      %v944 = vadd.f32 %v894, %v934
      %v945 = vadd.f32 %v895, %v935
      %v946 = vadd.f32 %v896, %v936
      %v947 = vadd.f32 %v897, %v937
      %948 = vset.pattern.permute.xlu0 2
      %949 = vperm.xlu0 %948, %v838
      %v950 = vpop.permute.xlu0 %949
      %952 = vset.pattern.permute.xlu0 2
      %953 = vperm.xlu0 %952, %v839
      %v954 = vpop.permute.xlu0 %953
      %956 = vset.pattern.permute.xlu0 2
      %957 = vperm.xlu0 %956, %v840
      %v958 = vpop.permute.xlu0 %957
      %960 = vset.pattern.permute.xlu0 2
      %961 = vperm.xlu0 %960, %v841
      %v962 = vpop.permute.xlu0 %961
      %964 = vset.pattern.permute.xlu0 2
      %965 = vperm.xlu0 %964, %v842
      %v966 = vpop.permute.xlu0 %965
      %v968 = vsub.f32 %v950, %v521
      %v969 = vsub.f32 %v950, %v525
      %v970 = vsub.f32 %v954, %v521
      %v971 = vsub.f32 %v954, %v525
      %v972 = vsub.f32 %v958, %v521
      %v973 = vsub.f32 %v958, %v525
      %v974 = vsub.f32 %v962, %v521
      %v975 = vsub.f32 %v962, %v525
      %v976 = vsub.f32 %v966, %v521
      %v977 = vsub.f32 %v966, %v525
      %v978 = vmul.f32 %v968, %v968
      %v979 = vmul.f32 %v969, %v969
      %v980 = vmul.f32 %v970, %v970
      %v981 = vmul.f32 %v971, %v971
      %v982 = vmul.f32 %v972, %v972
      %v983 = vmul.f32 %v973, %v973
      %v984 = vmul.f32 %v974, %v974
      %v985 = vmul.f32 %v975, %v975
      %v986 = vmul.f32 %v976, %v976
      %v987 = vmul.f32 %v977, %v977
      %v988 = vadd.f32 %v938, %v978
      %v989 = vadd.f32 %v939, %v979
      %v990 = vadd.f32 %v940, %v980
      %v991 = vadd.f32 %v941, %v981
      %v992 = vadd.f32 %v942, %v982
      %v993 = vadd.f32 %v943, %v983
      %v994 = vadd.f32 %v944, %v984
      %v995 = vadd.f32 %v945, %v985
      %v996 = vadd.f32 %v946, %v986
      %v997 = vadd.f32 %v947, %v987
      %999 = vset.pattern.permute.xlu0 0
      %1000 = vperm.xlu0 %999, %v844
      %v1001 = vpop.permute.xlu0 %1000
      %1004 = vset.pattern.permute.xlu0 0
      %1005 = vperm.xlu0 %1004, %v845
      %v1006 = vpop.permute.xlu0 %1005
      %1009 = vset.pattern.permute.xlu0 0
      %1010 = vperm.xlu0 %1009, %v846
      %v1011 = vpop.permute.xlu0 %1010
      %1014 = vset.pattern.permute.xlu0 0
      %1015 = vperm.xlu0 %1014, %v847
      %v1016 = vpop.permute.xlu0 %1015
      %1019 = vset.pattern.permute.xlu0 0
      %1020 = vperm.xlu0 %1019, %v848
      %v1021 = vpop.permute.xlu0 %1020
      %v1023 = vsub.f32 %v1001, %v595
      %v1024 = vsub.f32 %v1001, %v599
      %v1025 = vsub.f32 %v1006, %v595
      %v1026 = vsub.f32 %v1006, %v599
      %v1027 = vsub.f32 %v1011, %v595
      %v1028 = vsub.f32 %v1011, %v599
      %v1029 = vsub.f32 %v1016, %v595
      %v1030 = vsub.f32 %v1016, %v599
      %v1031 = vsub.f32 %v1021, %v595
      %v1032 = vsub.f32 %v1021, %v599
      %v1033 = vmul.f32 %v1023, %v1023
      %v1034 = vmul.f32 %v1024, %v1024
      %v1035 = vmul.f32 %v1025, %v1025
      %v1036 = vmul.f32 %v1026, %v1026
      %v1037 = vmul.f32 %v1027, %v1027
      %v1038 = vmul.f32 %v1028, %v1028
      %v1039 = vmul.f32 %v1029, %v1029
      %v1040 = vmul.f32 %v1030, %v1030
      %v1041 = vmul.f32 %v1031, %v1031
      %v1042 = vmul.f32 %v1032, %v1032
      %1043 = vset.pattern.permute.xlu0 1
      %1044 = vperm.xlu0 %1043, %v844
      %v1045 = vpop.permute.xlu0 %1044
      %1047 = vset.pattern.permute.xlu0 1
      %1048 = vperm.xlu0 %1047, %v845
      %v1049 = vpop.permute.xlu0 %1048
      %1051 = vset.pattern.permute.xlu0 1
      %1052 = vperm.xlu0 %1051, %v846
      %v1053 = vpop.permute.xlu0 %1052
      %1055 = vset.pattern.permute.xlu0 1
      %1056 = vperm.xlu0 %1055, %v847
      %v1057 = vpop.permute.xlu0 %1056
      %1059 = vset.pattern.permute.xlu0 1
      %1060 = vperm.xlu0 %1059, %v848
      %v1061 = vpop.permute.xlu0 %1060
      %v1063 = vsub.f32 %v1045, %v653
      %v1064 = vsub.f32 %v1045, %v657
      %v1065 = vsub.f32 %v1049, %v653
      %v1066 = vsub.f32 %v1049, %v657
      %v1067 = vsub.f32 %v1053, %v653
      %v1068 = vsub.f32 %v1053, %v657
      %v1069 = vsub.f32 %v1057, %v653
      %v1070 = vsub.f32 %v1057, %v657
      %v1071 = vsub.f32 %v1061, %v653
      %v1072 = vsub.f32 %v1061, %v657
      %v1073 = vmul.f32 %v1063, %v1063
      %v1074 = vmul.f32 %v1064, %v1064
      %v1075 = vmul.f32 %v1065, %v1065
      %v1076 = vmul.f32 %v1066, %v1066
      %v1077 = vmul.f32 %v1067, %v1067
      %v1078 = vmul.f32 %v1068, %v1068
      %v1079 = vmul.f32 %v1069, %v1069
      %v1080 = vmul.f32 %v1070, %v1070
      %v1081 = vmul.f32 %v1071, %v1071
      %v1082 = vmul.f32 %v1072, %v1072
      %v1083 = vadd.f32 %v1033, %v1073
      %v1084 = vadd.f32 %v1034, %v1074
      %v1085 = vadd.f32 %v1035, %v1075
      %v1086 = vadd.f32 %v1036, %v1076
      %v1087 = vadd.f32 %v1037, %v1077
      %v1088 = vadd.f32 %v1038, %v1078
      %v1089 = vadd.f32 %v1039, %v1079
      %v1090 = vadd.f32 %v1040, %v1080
      %v1091 = vadd.f32 %v1041, %v1081
      %v1092 = vadd.f32 %v1042, %v1082
      %1093 = vset.pattern.permute.xlu0 2
      %1094 = vperm.xlu0 %1093, %v844
      %v1095 = vpop.permute.xlu0 %1094
      %1097 = vset.pattern.permute.xlu0 2
      %1098 = vperm.xlu0 %1097, %v845
      %v1099 = vpop.permute.xlu0 %1098
      %1101 = vset.pattern.permute.xlu0 2
      %1102 = vperm.xlu0 %1101, %v846
      %v1103 = vpop.permute.xlu0 %1102
      %1105 = vset.pattern.permute.xlu0 2
      %1106 = vperm.xlu0 %1105, %v847
      %v1107 = vpop.permute.xlu0 %1106
      %1109 = vset.pattern.permute.xlu0 2
      %1110 = vperm.xlu0 %1109, %v848
      %v1111 = vpop.permute.xlu0 %1110
      %v1113 = vsub.f32 %v1095, %v721
      %v1114 = vsub.f32 %v1095, %v725
      %v1115 = vsub.f32 %v1099, %v721
      %v1116 = vsub.f32 %v1099, %v725
      %v1117 = vsub.f32 %v1103, %v721
      %v1118 = vsub.f32 %v1103, %v725
      %v1119 = vsub.f32 %v1107, %v721
      %v1120 = vsub.f32 %v1107, %v725
      %v1121 = vsub.f32 %v1111, %v721
      %v1122 = vsub.f32 %v1111, %v725
      %v1123 = vmul.f32 %v1113, %v1113
      %v1124 = vmul.f32 %v1114, %v1114
      %v1125 = vmul.f32 %v1115, %v1115
      %v1126 = vmul.f32 %v1116, %v1116
      %v1127 = vmul.f32 %v1117, %v1117
      %v1128 = vmul.f32 %v1118, %v1118
      %v1129 = vmul.f32 %v1119, %v1119
      %v1130 = vmul.f32 %v1120, %v1120
      %v1131 = vmul.f32 %v1121, %v1121
      %v1132 = vmul.f32 %v1122, %v1122
      %v1133 = vadd.f32 %v1083, %v1123
      %v1134 = vadd.f32 %v1084, %v1124
      %v1135 = vadd.f32 %v1085, %v1125
      %v1136 = vadd.f32 %v1086, %v1126
      %v1137 = vadd.f32 %v1087, %v1127
      %v1138 = vadd.f32 %v1088, %v1128
      %v1139 = vadd.f32 %v1089, %v1129
      %v1140 = vadd.f32 %v1090, %v1130
      %v1141 = vadd.f32 %v1091, %v1131
      %v1142 = vadd.f32 %v1092, %v1132
      %v1143 = vmin.f32 %v988, %v992
      %v1144 = vmin.f32 %v990, %v994
      %v1145 = vmin.f32 %v1143, %v996
      %v1146 = vmin.f32 %v1145, %v1144
      %v1147 = vrot.slane %v1146, 4
      %v1148 = vmin.f32 %v1146, %v1147
      %v1149 = vrot.slane %v1148, 2
      %v1150 = vmin.f32 %v1148, %v1149
      %v1151 = vrot.slane %v1150, 1
      %v1152 = vmin.f32 %v1150, %v1151
      %v1153 = vsel %vm766, %v989, inf
      %v1154 = vsel %vm766, %v991, inf
      %v1155 = vsel %vm766, %v993, inf
      %v1156 = vmin.f32 %v1153, %v1155
      %v1157 = vsel %vm766, %v995, inf
      %v1158 = vmin.f32 %v1154, %v1157
      %v1159 = vsel %vm766, %v997, inf
      %v1160 = vmin.f32 %v1156, %v1159
      %v1161 = vmin.f32 %v1160, %v1158
      %v1162 = vrot.slane %v1161, 4
      %v1163 = vmin.f32 %v1161, %v1162
      %v1164 = vrot.slane %v1163, 2
      %v1165 = vmin.f32 %v1163, %v1164
      %v1166 = vrot.slane %v1165, 1
      %v1167 = vmin.f32 %v1165, %v1166
      %v1168 = vmin.f32 %v1133, %v1137
      %v1169 = vmin.f32 %v1135, %v1139
      %v1170 = vmin.f32 %v1168, %v1141
      %v1171 = vmin.f32 %v1170, %v1169
      %v1172 = vrot.slane %v1171, 4
      %v1173 = vmin.f32 %v1171, %v1172
      %v1174 = vrot.slane %v1173, 2
      %v1175 = vmin.f32 %v1173, %v1174
      %v1176 = vrot.slane %v1175, 1
      %v1177 = vmin.f32 %v1175, %v1176
      %v1178 = vsel %vm766, %v1134, inf
      %v1179 = vsel %vm766, %v1136, inf
      %v1180 = vsel %vm766, %v1138, inf
      %v1181 = vmin.f32 %v1178, %v1180
      %v1182 = vsel %vm766, %v1140, inf
      %v1183 = vmin.f32 %v1179, %v1182
      %v1184 = vsel %vm766, %v1142, inf
      %v1185 = vmin.f32 %v1181, %v1184
      %v1186 = vmin.f32 %v1185, %v1183
      %v1187 = vrot.slane %v1186, 4
      %v1188 = vmin.f32 %v1186, %v1187
      %v1189 = vrot.slane %v1188, 2
      %v1190 = vmin.f32 %v1188, %v1189
      %v1191 = vrot.slane %v1190, 1
      %v1192 = vmin.f32 %v1190, %v1191
      %v1194 = vlaneseq
      %v1195 = vshrl.u32 %v1194, 7
      %v1196 = vsub.s32 0, %v1195
      %v1197 = vrot.slane %v850, %v1196
      %v1198 = vlaneseq
      %v1199 = vshrl.u32 %v1198, 7
      %v1200 = vsub.s32 1, %v1199
      %v1201 = vrot.slane %v850, %v1200
      %v1204 = vmul.f32 %v1152, %v1197
      %v1205 = vmul.f32 %v1167, %v1201
      %v1206 = vadd.f32 %v835, %v1204
      %v1207 = vadd.f32 %v836, %v1205
      %v1209 = vlaneseq
      %v1210 = vshrl.u32 %v1209, 7
      %v1211 = vsub.s32 0, %v1210
      %v1212 = vrot.slane %v852, %v1211
      %v1213 = vlaneseq
      %v1214 = vshrl.u32 %v1213, 7
      %v1215 = vsub.s32 1, %v1214
      %v1216 = vrot.slane %v852, %v1215
      %v1219 = vmul.f32 %v1177, %v1212
      %v1220 = vmul.f32 %v1192, %v1216
      %v1221 = vadd.f32 %v1206, %v1219
      %v1222 = vadd.f32 %v1207, %v1220
      %s1223 = scalar_lea.vmem %s315, 80
      %v1224 = vld [vmem:[%s1223] sm:$0xff]
      %v1225 = vld [vmem:[%s1223 + $0x8] sm:$0xff]
      %v1226 = vld [vmem:[%s1223 + $0x10] sm:$0xff]
      %v1227 = vld [vmem:[%s1223 + $0x18] sm:$0xff]
      %v1228 = vld [vmem:[%s1223 + $0x20] sm:$0xff]
      %s1229 = scalar_lea.vmem %s320, 80
      %v1230 = vld [vmem:[%s1229] sm:$0xff]
      %v1231 = vld [vmem:[%s1229 + $0x8] sm:$0xff]
      %v1232 = vld [vmem:[%s1229 + $0x10] sm:$0xff]
      %v1233 = vld [vmem:[%s1229 + $0x18] sm:$0xff]
      %v1234 = vld [vmem:[%s1229 + $0x20] sm:$0xff]
      %s1235 = scalar_lea.vmem %s334, 4
      %v1236 = vld [vmem:[%s1235] sm:$0x3]
      %s1237 = scalar_lea.vmem %s338, 4
      %v1238 = vld [vmem:[%s1237] sm:$0x3]
      %1240 = vset.pattern.permute.xlu0 0
      %1241 = vperm.xlu0 %1240, %v1224
      %v1242 = vpop.permute.xlu0 %1241
      %1245 = vset.pattern.permute.xlu0 0
      %1246 = vperm.xlu0 %1245, %v1225
      %v1247 = vpop.permute.xlu0 %1246
      %1250 = vset.pattern.permute.xlu0 0
      %1251 = vperm.xlu0 %1250, %v1226
      %v1252 = vpop.permute.xlu0 %1251
      %1255 = vset.pattern.permute.xlu0 0
      %1256 = vperm.xlu0 %1255, %v1227
      %v1257 = vpop.permute.xlu0 %1256
      %1260 = vset.pattern.permute.xlu0 0
      %1261 = vperm.xlu0 %1260, %v1228
      %v1262 = vpop.permute.xlu0 %1261
      %v1264 = vsub.f32 %v1242, %v395
      %v1265 = vsub.f32 %v1242, %v399
      %v1266 = vsub.f32 %v1247, %v395
      %v1267 = vsub.f32 %v1247, %v399
      %v1268 = vsub.f32 %v1252, %v395
      %v1269 = vsub.f32 %v1252, %v399
      %v1270 = vsub.f32 %v1257, %v395
      %v1271 = vsub.f32 %v1257, %v399
      %v1272 = vsub.f32 %v1262, %v395
      %v1273 = vsub.f32 %v1262, %v399
      %v1274 = vmul.f32 %v1264, %v1264
      %v1275 = vmul.f32 %v1265, %v1265
      %v1276 = vmul.f32 %v1266, %v1266
      %v1277 = vmul.f32 %v1267, %v1267
      %v1278 = vmul.f32 %v1268, %v1268
      %v1279 = vmul.f32 %v1269, %v1269
      %v1280 = vmul.f32 %v1270, %v1270
      %v1281 = vmul.f32 %v1271, %v1271
      %v1282 = vmul.f32 %v1272, %v1272
      %v1283 = vmul.f32 %v1273, %v1273
      %1284 = vset.pattern.permute.xlu0 1
      %1285 = vperm.xlu0 %1284, %v1224
      %v1286 = vpop.permute.xlu0 %1285
      %1288 = vset.pattern.permute.xlu0 1
      %1289 = vperm.xlu0 %1288, %v1225
      %v1290 = vpop.permute.xlu0 %1289
      %1292 = vset.pattern.permute.xlu0 1
      %1293 = vperm.xlu0 %1292, %v1226
      %v1294 = vpop.permute.xlu0 %1293
      %1296 = vset.pattern.permute.xlu0 1
      %1297 = vperm.xlu0 %1296, %v1227
      %v1298 = vpop.permute.xlu0 %1297
      %1300 = vset.pattern.permute.xlu0 1
      %1301 = vperm.xlu0 %1300, %v1228
      %v1302 = vpop.permute.xlu0 %1301
      %v1304 = vsub.f32 %v1286, %v453
      %v1305 = vsub.f32 %v1286, %v457
      %v1306 = vsub.f32 %v1290, %v453
      %v1307 = vsub.f32 %v1290, %v457
      %v1308 = vsub.f32 %v1294, %v453
      %v1309 = vsub.f32 %v1294, %v457
      %v1310 = vsub.f32 %v1298, %v453
      %v1311 = vsub.f32 %v1298, %v457
      %v1312 = vsub.f32 %v1302, %v453
      %v1313 = vsub.f32 %v1302, %v457
      %v1314 = vmul.f32 %v1304, %v1304
      %v1315 = vmul.f32 %v1305, %v1305
      %v1316 = vmul.f32 %v1306, %v1306
      %v1317 = vmul.f32 %v1307, %v1307
      %v1318 = vmul.f32 %v1308, %v1308
      %v1319 = vmul.f32 %v1309, %v1309
      %v1320 = vmul.f32 %v1310, %v1310
      %v1321 = vmul.f32 %v1311, %v1311
      %v1322 = vmul.f32 %v1312, %v1312
      %v1323 = vmul.f32 %v1313, %v1313
      %v1324 = vadd.f32 %v1274, %v1314
      %v1325 = vadd.f32 %v1275, %v1315
      %v1326 = vadd.f32 %v1276, %v1316
      %v1327 = vadd.f32 %v1277, %v1317
      %v1328 = vadd.f32 %v1278, %v1318
      %v1329 = vadd.f32 %v1279, %v1319
      %v1330 = vadd.f32 %v1280, %v1320
      %v1331 = vadd.f32 %v1281, %v1321
      %v1332 = vadd.f32 %v1282, %v1322
      %v1333 = vadd.f32 %v1283, %v1323
      %1334 = vset.pattern.permute.xlu0 2
      %1335 = vperm.xlu0 %1334, %v1224
      %v1336 = vpop.permute.xlu0 %1335
      %1338 = vset.pattern.permute.xlu0 2
      %1339 = vperm.xlu0 %1338, %v1225
      %v1340 = vpop.permute.xlu0 %1339
      %1342 = vset.pattern.permute.xlu0 2
      %1343 = vperm.xlu0 %1342, %v1226
      %v1344 = vpop.permute.xlu0 %1343
      %1346 = vset.pattern.permute.xlu0 2
      %1347 = vperm.xlu0 %1346, %v1227
      %v1348 = vpop.permute.xlu0 %1347
      %1350 = vset.pattern.permute.xlu0 2
      %1351 = vperm.xlu0 %1350, %v1228
      %v1352 = vpop.permute.xlu0 %1351
      %v1354 = vsub.f32 %v1336, %v521
      %v1355 = vsub.f32 %v1336, %v525
      %v1356 = vsub.f32 %v1340, %v521
      %v1357 = vsub.f32 %v1340, %v525
      %v1358 = vsub.f32 %v1344, %v521
      %v1359 = vsub.f32 %v1344, %v525
      %v1360 = vsub.f32 %v1348, %v521
      %v1361 = vsub.f32 %v1348, %v525
      %v1362 = vsub.f32 %v1352, %v521
      %v1363 = vsub.f32 %v1352, %v525
      %v1364 = vmul.f32 %v1354, %v1354
      %v1365 = vmul.f32 %v1355, %v1355
      %v1366 = vmul.f32 %v1356, %v1356
      %v1367 = vmul.f32 %v1357, %v1357
      %v1368 = vmul.f32 %v1358, %v1358
      %v1369 = vmul.f32 %v1359, %v1359
      %v1370 = vmul.f32 %v1360, %v1360
      %v1371 = vmul.f32 %v1361, %v1361
      %v1372 = vmul.f32 %v1362, %v1362
      %v1373 = vmul.f32 %v1363, %v1363
      %v1374 = vadd.f32 %v1324, %v1364
      %v1375 = vadd.f32 %v1325, %v1365
      %v1376 = vadd.f32 %v1326, %v1366
      %v1377 = vadd.f32 %v1327, %v1367
      %v1378 = vadd.f32 %v1328, %v1368
      %v1379 = vadd.f32 %v1329, %v1369
      %v1380 = vadd.f32 %v1330, %v1370
      %v1381 = vadd.f32 %v1331, %v1371
      %v1382 = vadd.f32 %v1332, %v1372
      %v1383 = vadd.f32 %v1333, %v1373
      %1385 = vset.pattern.permute.xlu0 0
      %1386 = vperm.xlu0 %1385, %v1230
      %v1387 = vpop.permute.xlu0 %1386
      %1390 = vset.pattern.permute.xlu0 0
      %1391 = vperm.xlu0 %1390, %v1231
      %v1392 = vpop.permute.xlu0 %1391
      %1395 = vset.pattern.permute.xlu0 0
      %1396 = vperm.xlu0 %1395, %v1232
      %v1397 = vpop.permute.xlu0 %1396
      %1400 = vset.pattern.permute.xlu0 0
      %1401 = vperm.xlu0 %1400, %v1233
      %v1402 = vpop.permute.xlu0 %1401
      %1405 = vset.pattern.permute.xlu0 0
      %1406 = vperm.xlu0 %1405, %v1234
      %v1407 = vpop.permute.xlu0 %1406
      %v1409 = vsub.f32 %v1387, %v595
      %v1410 = vsub.f32 %v1387, %v599
      %v1411 = vsub.f32 %v1392, %v595
      %v1412 = vsub.f32 %v1392, %v599
      %v1413 = vsub.f32 %v1397, %v595
      %v1414 = vsub.f32 %v1397, %v599
      %v1415 = vsub.f32 %v1402, %v595
      %v1416 = vsub.f32 %v1402, %v599
      %v1417 = vsub.f32 %v1407, %v595
      %v1418 = vsub.f32 %v1407, %v599
      %v1419 = vmul.f32 %v1409, %v1409
      %v1420 = vmul.f32 %v1410, %v1410
      %v1421 = vmul.f32 %v1411, %v1411
      %v1422 = vmul.f32 %v1412, %v1412
      %v1423 = vmul.f32 %v1413, %v1413
      %v1424 = vmul.f32 %v1414, %v1414
      %v1425 = vmul.f32 %v1415, %v1415
      %v1426 = vmul.f32 %v1416, %v1416
      %v1427 = vmul.f32 %v1417, %v1417
      %v1428 = vmul.f32 %v1418, %v1418
      %1429 = vset.pattern.permute.xlu0 1
      %1430 = vperm.xlu0 %1429, %v1230
      %v1431 = vpop.permute.xlu0 %1430
      %1433 = vset.pattern.permute.xlu0 1
      %1434 = vperm.xlu0 %1433, %v1231
      %v1435 = vpop.permute.xlu0 %1434
      %1437 = vset.pattern.permute.xlu0 1
      %1438 = vperm.xlu0 %1437, %v1232
      %v1439 = vpop.permute.xlu0 %1438
      %1441 = vset.pattern.permute.xlu0 1
      %1442 = vperm.xlu0 %1441, %v1233
      %v1443 = vpop.permute.xlu0 %1442
      %1445 = vset.pattern.permute.xlu0 1
      %1446 = vperm.xlu0 %1445, %v1234
      %v1447 = vpop.permute.xlu0 %1446
      %v1449 = vsub.f32 %v1431, %v653
      %v1450 = vsub.f32 %v1431, %v657
      %v1451 = vsub.f32 %v1435, %v653
      %v1452 = vsub.f32 %v1435, %v657
      %v1453 = vsub.f32 %v1439, %v653
      %v1454 = vsub.f32 %v1439, %v657
      %v1455 = vsub.f32 %v1443, %v653
      %v1456 = vsub.f32 %v1443, %v657
      %v1457 = vsub.f32 %v1447, %v653
      %v1458 = vsub.f32 %v1447, %v657
      %v1459 = vmul.f32 %v1449, %v1449
      %v1460 = vmul.f32 %v1450, %v1450
      %v1461 = vmul.f32 %v1451, %v1451
      %v1462 = vmul.f32 %v1452, %v1452
      %v1463 = vmul.f32 %v1453, %v1453
      %v1464 = vmul.f32 %v1454, %v1454
      %v1465 = vmul.f32 %v1455, %v1455
      %v1466 = vmul.f32 %v1456, %v1456
      %v1467 = vmul.f32 %v1457, %v1457
      %v1468 = vmul.f32 %v1458, %v1458
      %v1469 = vadd.f32 %v1419, %v1459
      %v1470 = vadd.f32 %v1420, %v1460
      %v1471 = vadd.f32 %v1421, %v1461
      %v1472 = vadd.f32 %v1422, %v1462
      %v1473 = vadd.f32 %v1423, %v1463
      %v1474 = vadd.f32 %v1424, %v1464
      %v1475 = vadd.f32 %v1425, %v1465
      %v1476 = vadd.f32 %v1426, %v1466
      %v1477 = vadd.f32 %v1427, %v1467
      %v1478 = vadd.f32 %v1428, %v1468
      %1479 = vset.pattern.permute.xlu0 2
      %1480 = vperm.xlu0 %1479, %v1230
      %v1481 = vpop.permute.xlu0 %1480
      %1483 = vset.pattern.permute.xlu0 2
      %1484 = vperm.xlu0 %1483, %v1231
      %v1485 = vpop.permute.xlu0 %1484
      %1487 = vset.pattern.permute.xlu0 2
      %1488 = vperm.xlu0 %1487, %v1232
      %v1489 = vpop.permute.xlu0 %1488
      %1491 = vset.pattern.permute.xlu0 2
      %1492 = vperm.xlu0 %1491, %v1233
      %v1493 = vpop.permute.xlu0 %1492
      %1495 = vset.pattern.permute.xlu0 2
      %1496 = vperm.xlu0 %1495, %v1234
      %v1497 = vpop.permute.xlu0 %1496
      %v1499 = vsub.f32 %v1481, %v721
      %v1500 = vsub.f32 %v1481, %v725
      %v1501 = vsub.f32 %v1485, %v721
      %v1502 = vsub.f32 %v1485, %v725
      %v1503 = vsub.f32 %v1489, %v721
      %v1504 = vsub.f32 %v1489, %v725
      %v1505 = vsub.f32 %v1493, %v721
      %v1506 = vsub.f32 %v1493, %v725
      %v1507 = vsub.f32 %v1497, %v721
      %v1508 = vsub.f32 %v1497, %v725
      %v1509 = vmul.f32 %v1499, %v1499
      %v1510 = vmul.f32 %v1500, %v1500
      %v1511 = vmul.f32 %v1501, %v1501
      %v1512 = vmul.f32 %v1502, %v1502
      %v1513 = vmul.f32 %v1503, %v1503
      %v1514 = vmul.f32 %v1504, %v1504
      %v1515 = vmul.f32 %v1505, %v1505
      %v1516 = vmul.f32 %v1506, %v1506
      %v1517 = vmul.f32 %v1507, %v1507
      %v1518 = vmul.f32 %v1508, %v1508
      %v1519 = vadd.f32 %v1469, %v1509
      %v1520 = vadd.f32 %v1470, %v1510
      %v1521 = vadd.f32 %v1471, %v1511
      %v1522 = vadd.f32 %v1472, %v1512
      %v1523 = vadd.f32 %v1473, %v1513
      %v1524 = vadd.f32 %v1474, %v1514
      %v1525 = vadd.f32 %v1475, %v1515
      %v1526 = vadd.f32 %v1476, %v1516
      %v1527 = vadd.f32 %v1477, %v1517
      %v1528 = vadd.f32 %v1478, %v1518
      %v1529 = vmin.f32 %v1374, %v1378
      %v1530 = vmin.f32 %v1376, %v1380
      %v1531 = vmin.f32 %v1529, %v1382
      %v1532 = vmin.f32 %v1531, %v1530
      %v1533 = vrot.slane %v1532, 4
      %v1534 = vmin.f32 %v1532, %v1533
      %v1535 = vrot.slane %v1534, 2
      %v1536 = vmin.f32 %v1534, %v1535
      %v1537 = vrot.slane %v1536, 1
      %v1538 = vmin.f32 %v1536, %v1537
      %v1539 = vsel %vm766, %v1375, inf
      %v1540 = vsel %vm766, %v1377, inf
      %v1541 = vsel %vm766, %v1379, inf
      %v1542 = vmin.f32 %v1539, %v1541
      %v1543 = vsel %vm766, %v1381, inf
      %v1544 = vmin.f32 %v1540, %v1543
      %v1545 = vsel %vm766, %v1383, inf
      %v1546 = vmin.f32 %v1542, %v1545
      %v1547 = vmin.f32 %v1546, %v1544
      %v1548 = vrot.slane %v1547, 4
      %v1549 = vmin.f32 %v1547, %v1548
      %v1550 = vrot.slane %v1549, 2
      %v1551 = vmin.f32 %v1549, %v1550
      %v1552 = vrot.slane %v1551, 1
      %v1553 = vmin.f32 %v1551, %v1552
      %v1554 = vmin.f32 %v1519, %v1523
      %v1555 = vmin.f32 %v1521, %v1525
      %v1556 = vmin.f32 %v1554, %v1527
      %v1557 = vmin.f32 %v1556, %v1555
      %v1558 = vrot.slane %v1557, 4
      %v1559 = vmin.f32 %v1557, %v1558
      %v1560 = vrot.slane %v1559, 2
      %v1561 = vmin.f32 %v1559, %v1560
      %v1562 = vrot.slane %v1561, 1
      %v1563 = vmin.f32 %v1561, %v1562
      %v1564 = vsel %vm766, %v1520, inf
      %v1565 = vsel %vm766, %v1522, inf
      %v1566 = vsel %vm766, %v1524, inf
      %v1567 = vmin.f32 %v1564, %v1566
      %v1568 = vsel %vm766, %v1526, inf
      %v1569 = vmin.f32 %v1565, %v1568
      %v1570 = vsel %vm766, %v1528, inf
      %v1571 = vmin.f32 %v1567, %v1570
      %v1572 = vmin.f32 %v1571, %v1569
      %v1573 = vrot.slane %v1572, 4
      %v1574 = vmin.f32 %v1572, %v1573
      %v1575 = vrot.slane %v1574, 2
      %v1576 = vmin.f32 %v1574, %v1575
      %v1577 = vrot.slane %v1576, 1
      %v1578 = vmin.f32 %v1576, %v1577
      %v1580 = vlaneseq
      %v1581 = vshrl.u32 %v1580, 7
      %v1582 = vsub.s32 0, %v1581
      %v1583 = vrot.slane %v1236, %v1582
      %v1584 = vlaneseq
      %v1585 = vshrl.u32 %v1584, 7
      %v1586 = vsub.s32 1, %v1585
      %v1587 = vrot.slane %v1236, %v1586
      %v1590 = vmul.f32 %v1538, %v1583
      %v1591 = vmul.f32 %v1553, %v1587
      %v1592 = vadd.f32 %v1221, %v1590
      %v1593 = vadd.f32 %v1222, %v1591
      %v1595 = vlaneseq
      %v1596 = vshrl.u32 %v1595, 7
      %v1597 = vsub.s32 0, %v1596
      %v1598 = vrot.slane %v1238, %v1597
      %v1599 = vlaneseq
      %v1600 = vshrl.u32 %v1599, 7
      %v1601 = vsub.s32 1, %v1600
      %v1602 = vrot.slane %v1238, %v1601
      %v1605 = vmul.f32 %v1563, %v1598
      %v1606 = vmul.f32 %v1578, %v1602
      %v1607 = vadd.f32 %v1592, %v1605
      %v1608 = vadd.f32 %v1593, %v1606
      %s1609 = scalar_lea.vmem %s315, 120
      %v1610 = vld [vmem:[%s1609] sm:$0xff]
      %v1611 = vld [vmem:[%s1609 + $0x8] sm:$0xff]
      %v1612 = vld [vmem:[%s1609 + $0x10] sm:$0xff]
      %v1613 = vld [vmem:[%s1609 + $0x18] sm:$0xff]
      %v1614 = vld [vmem:[%s1609 + $0x20] sm:$0xff]
      %s1615 = scalar_lea.vmem %s320, 120
      %v1616 = vld [vmem:[%s1615] sm:$0xff]
      %v1617 = vld [vmem:[%s1615 + $0x8] sm:$0xff]
      %v1618 = vld [vmem:[%s1615 + $0x10] sm:$0xff]
      %v1619 = vld [vmem:[%s1615 + $0x18] sm:$0xff]
      %v1620 = vld [vmem:[%s1615 + $0x20] sm:$0xff]
      %s1621 = scalar_lea.vmem %s334, 6
      %v1622 = vld [vmem:[%s1621] sm:$0x3]
      %s1623 = scalar_lea.vmem %s338, 6
      %v1624 = vld [vmem:[%s1623] sm:$0x3]
      %1626 = vset.pattern.permute.xlu0 0
      %1627 = vperm.xlu0 %1626, %v1610
      %v1628 = vpop.permute.xlu0 %1627
      %1631 = vset.pattern.permute.xlu0 0
      %1632 = vperm.xlu0 %1631, %v1611
      %v1633 = vpop.permute.xlu0 %1632
      %1636 = vset.pattern.permute.xlu0 0
      %1637 = vperm.xlu0 %1636, %v1612
      %v1638 = vpop.permute.xlu0 %1637
      %1641 = vset.pattern.permute.xlu0 0
      %1642 = vperm.xlu0 %1641, %v1613
      %v1643 = vpop.permute.xlu0 %1642
      %1646 = vset.pattern.permute.xlu0 0
      %1647 = vperm.xlu0 %1646, %v1614
      %v1648 = vpop.permute.xlu0 %1647
      %v1650 = vsub.f32 %v1628, %v395
      %v1651 = vsub.f32 %v1628, %v399
      %v1652 = vsub.f32 %v1633, %v395
      %v1653 = vsub.f32 %v1633, %v399
      %v1654 = vsub.f32 %v1638, %v395
      %v1655 = vsub.f32 %v1638, %v399
      %v1656 = vsub.f32 %v1643, %v395
      %v1657 = vsub.f32 %v1643, %v399
      %v1658 = vsub.f32 %v1648, %v395
      %v1659 = vsub.f32 %v1648, %v399
      %v1660 = vmul.f32 %v1650, %v1650
      %v1661 = vmul.f32 %v1651, %v1651
      %v1662 = vmul.f32 %v1652, %v1652
      %v1663 = vmul.f32 %v1653, %v1653
      %v1664 = vmul.f32 %v1654, %v1654
      %v1665 = vmul.f32 %v1655, %v1655
      %v1666 = vmul.f32 %v1656, %v1656
      %v1667 = vmul.f32 %v1657, %v1657
      %v1668 = vmul.f32 %v1658, %v1658
      %v1669 = vmul.f32 %v1659, %v1659
      %1670 = vset.pattern.permute.xlu0 1
      %1671 = vperm.xlu0 %1670, %v1610
      %v1672 = vpop.permute.xlu0 %1671
      %1674 = vset.pattern.permute.xlu0 1
      %1675 = vperm.xlu0 %1674, %v1611
      %v1676 = vpop.permute.xlu0 %1675
      %1678 = vset.pattern.permute.xlu0 1
      %1679 = vperm.xlu0 %1678, %v1612
      %v1680 = vpop.permute.xlu0 %1679
      %1682 = vset.pattern.permute.xlu0 1
      %1683 = vperm.xlu0 %1682, %v1613
      %v1684 = vpop.permute.xlu0 %1683
      %1686 = vset.pattern.permute.xlu0 1
      %1687 = vperm.xlu0 %1686, %v1614
      %v1688 = vpop.permute.xlu0 %1687
      %v1690 = vsub.f32 %v1672, %v453
      %v1691 = vsub.f32 %v1672, %v457
      %v1692 = vsub.f32 %v1676, %v453
      %v1693 = vsub.f32 %v1676, %v457
      %v1694 = vsub.f32 %v1680, %v453
      %v1695 = vsub.f32 %v1680, %v457
      %v1696 = vsub.f32 %v1684, %v453
      %v1697 = vsub.f32 %v1684, %v457
      %v1698 = vsub.f32 %v1688, %v453
      %v1699 = vsub.f32 %v1688, %v457
      %v1700 = vmul.f32 %v1690, %v1690
      %v1701 = vmul.f32 %v1691, %v1691
      %v1702 = vmul.f32 %v1692, %v1692
      %v1703 = vmul.f32 %v1693, %v1693
      %v1704 = vmul.f32 %v1694, %v1694
      %v1705 = vmul.f32 %v1695, %v1695
      %v1706 = vmul.f32 %v1696, %v1696
      %v1707 = vmul.f32 %v1697, %v1697
      %v1708 = vmul.f32 %v1698, %v1698
      %v1709 = vmul.f32 %v1699, %v1699
      %v1710 = vadd.f32 %v1660, %v1700
      %v1711 = vadd.f32 %v1661, %v1701
      %v1712 = vadd.f32 %v1662, %v1702
      %v1713 = vadd.f32 %v1663, %v1703
      %v1714 = vadd.f32 %v1664, %v1704
      %v1715 = vadd.f32 %v1665, %v1705
      %v1716 = vadd.f32 %v1666, %v1706
      %v1717 = vadd.f32 %v1667, %v1707
      %v1718 = vadd.f32 %v1668, %v1708
      %v1719 = vadd.f32 %v1669, %v1709
      %1720 = vset.pattern.permute.xlu0 2
      %1721 = vperm.xlu0 %1720, %v1610
      %v1722 = vpop.permute.xlu0 %1721
      %1724 = vset.pattern.permute.xlu0 2
      %1725 = vperm.xlu0 %1724, %v1611
      %v1726 = vpop.permute.xlu0 %1725
      %1728 = vset.pattern.permute.xlu0 2
      %1729 = vperm.xlu0 %1728, %v1612
      %v1730 = vpop.permute.xlu0 %1729
      %1732 = vset.pattern.permute.xlu0 2
      %1733 = vperm.xlu0 %1732, %v1613
      %v1734 = vpop.permute.xlu0 %1733
      %1736 = vset.pattern.permute.xlu0 2
      %1737 = vperm.xlu0 %1736, %v1614
      %v1738 = vpop.permute.xlu0 %1737
      %v1740 = vsub.f32 %v1722, %v521
      %v1741 = vsub.f32 %v1722, %v525
      %v1742 = vsub.f32 %v1726, %v521
      %v1743 = vsub.f32 %v1726, %v525
      %v1744 = vsub.f32 %v1730, %v521
      %v1745 = vsub.f32 %v1730, %v525
      %v1746 = vsub.f32 %v1734, %v521
      %v1747 = vsub.f32 %v1734, %v525
      %v1748 = vsub.f32 %v1738, %v521
      %v1749 = vsub.f32 %v1738, %v525
      %v1750 = vmul.f32 %v1740, %v1740
      %v1751 = vmul.f32 %v1741, %v1741
      %v1752 = vmul.f32 %v1742, %v1742
      %v1753 = vmul.f32 %v1743, %v1743
      %v1754 = vmul.f32 %v1744, %v1744
      %v1755 = vmul.f32 %v1745, %v1745
      %v1756 = vmul.f32 %v1746, %v1746
      %v1757 = vmul.f32 %v1747, %v1747
      %v1758 = vmul.f32 %v1748, %v1748
      %v1759 = vmul.f32 %v1749, %v1749
      %v1760 = vadd.f32 %v1710, %v1750
      %v1761 = vadd.f32 %v1711, %v1751
      %v1762 = vadd.f32 %v1712, %v1752
      %v1763 = vadd.f32 %v1713, %v1753
      %v1764 = vadd.f32 %v1714, %v1754
      %v1765 = vadd.f32 %v1715, %v1755
      %v1766 = vadd.f32 %v1716, %v1756
      %v1767 = vadd.f32 %v1717, %v1757
      %v1768 = vadd.f32 %v1718, %v1758
      %v1769 = vadd.f32 %v1719, %v1759
      %1771 = vset.pattern.permute.xlu0 0
      %1772 = vperm.xlu0 %1771, %v1616
      %v1773 = vpop.permute.xlu0 %1772
      %1776 = vset.pattern.permute.xlu0 0
      %1777 = vperm.xlu0 %1776, %v1617
      %v1778 = vpop.permute.xlu0 %1777
      %1781 = vset.pattern.permute.xlu0 0
      %1782 = vperm.xlu0 %1781, %v1618
      %v1783 = vpop.permute.xlu0 %1782
      %1786 = vset.pattern.permute.xlu0 0
      %1787 = vperm.xlu0 %1786, %v1619
      %v1788 = vpop.permute.xlu0 %1787
      %1791 = vset.pattern.permute.xlu0 0
      %1792 = vperm.xlu0 %1791, %v1620
      %v1793 = vpop.permute.xlu0 %1792
      %v1795 = vsub.f32 %v1773, %v595
      %v1796 = vsub.f32 %v1773, %v599
      %v1797 = vsub.f32 %v1778, %v595
      %v1798 = vsub.f32 %v1778, %v599
      %v1799 = vsub.f32 %v1783, %v595
      %v1800 = vsub.f32 %v1783, %v599
      %v1801 = vsub.f32 %v1788, %v595
      %v1802 = vsub.f32 %v1788, %v599
      %v1803 = vsub.f32 %v1793, %v595
      %v1804 = vsub.f32 %v1793, %v599
      %v1805 = vmul.f32 %v1795, %v1795
      %v1806 = vmul.f32 %v1796, %v1796
      %v1807 = vmul.f32 %v1797, %v1797
      %v1808 = vmul.f32 %v1798, %v1798
      %v1809 = vmul.f32 %v1799, %v1799
      %v1810 = vmul.f32 %v1800, %v1800
      %v1811 = vmul.f32 %v1801, %v1801
      %v1812 = vmul.f32 %v1802, %v1802
      %v1813 = vmul.f32 %v1803, %v1803
      %v1814 = vmul.f32 %v1804, %v1804
      %1815 = vset.pattern.permute.xlu0 1
      %1816 = vperm.xlu0 %1815, %v1616
      %v1817 = vpop.permute.xlu0 %1816
      %1819 = vset.pattern.permute.xlu0 1
      %1820 = vperm.xlu0 %1819, %v1617
      %v1821 = vpop.permute.xlu0 %1820
      %1823 = vset.pattern.permute.xlu0 1
      %1824 = vperm.xlu0 %1823, %v1618
      %v1825 = vpop.permute.xlu0 %1824
      %1827 = vset.pattern.permute.xlu0 1
      %1828 = vperm.xlu0 %1827, %v1619
      %v1829 = vpop.permute.xlu0 %1828
      %1831 = vset.pattern.permute.xlu0 1
      %1832 = vperm.xlu0 %1831, %v1620
      %v1833 = vpop.permute.xlu0 %1832
      %v1835 = vsub.f32 %v1817, %v653
      %v1836 = vsub.f32 %v1817, %v657
      %v1837 = vsub.f32 %v1821, %v653
      %v1838 = vsub.f32 %v1821, %v657
      %v1839 = vsub.f32 %v1825, %v653
      %v1840 = vsub.f32 %v1825, %v657
      %v1841 = vsub.f32 %v1829, %v653
      %v1842 = vsub.f32 %v1829, %v657
      %v1843 = vsub.f32 %v1833, %v653
      %v1844 = vsub.f32 %v1833, %v657
      %v1845 = vmul.f32 %v1835, %v1835
      %v1846 = vmul.f32 %v1836, %v1836
      %v1847 = vmul.f32 %v1837, %v1837
      %v1848 = vmul.f32 %v1838, %v1838
      %v1849 = vmul.f32 %v1839, %v1839
      %v1850 = vmul.f32 %v1840, %v1840
      %v1851 = vmul.f32 %v1841, %v1841
      %v1852 = vmul.f32 %v1842, %v1842
      %v1853 = vmul.f32 %v1843, %v1843
      %v1854 = vmul.f32 %v1844, %v1844
      %v1855 = vadd.f32 %v1805, %v1845
      %v1856 = vadd.f32 %v1806, %v1846
      %v1857 = vadd.f32 %v1807, %v1847
      %v1858 = vadd.f32 %v1808, %v1848
      %v1859 = vadd.f32 %v1809, %v1849
      %v1860 = vadd.f32 %v1810, %v1850
      %v1861 = vadd.f32 %v1811, %v1851
      %v1862 = vadd.f32 %v1812, %v1852
      %v1863 = vadd.f32 %v1813, %v1853
      %v1864 = vadd.f32 %v1814, %v1854
      %1865 = vset.pattern.permute.xlu0 2
      %1866 = vperm.xlu0 %1865, %v1616
      %v1867 = vpop.permute.xlu0 %1866
      %1869 = vset.pattern.permute.xlu0 2
      %1870 = vperm.xlu0 %1869, %v1617
      %v1871 = vpop.permute.xlu0 %1870
      %1873 = vset.pattern.permute.xlu0 2
      %1874 = vperm.xlu0 %1873, %v1618
      %v1875 = vpop.permute.xlu0 %1874
      %1877 = vset.pattern.permute.xlu0 2
      %1878 = vperm.xlu0 %1877, %v1619
      %v1879 = vpop.permute.xlu0 %1878
      %1881 = vset.pattern.permute.xlu0 2
      %1882 = vperm.xlu0 %1881, %v1620
      %v1883 = vpop.permute.xlu0 %1882
      %v1885 = vsub.f32 %v1867, %v721
      %v1886 = vsub.f32 %v1867, %v725
      %v1887 = vsub.f32 %v1871, %v721
      %v1888 = vsub.f32 %v1871, %v725
      %v1889 = vsub.f32 %v1875, %v721
      %v1890 = vsub.f32 %v1875, %v725
      %v1891 = vsub.f32 %v1879, %v721
      %v1892 = vsub.f32 %v1879, %v725
      %v1893 = vsub.f32 %v1883, %v721
      %v1894 = vsub.f32 %v1883, %v725
      %v1895 = vmul.f32 %v1885, %v1885
      %v1896 = vmul.f32 %v1886, %v1886
      %v1897 = vmul.f32 %v1887, %v1887
      %v1898 = vmul.f32 %v1888, %v1888
      %v1899 = vmul.f32 %v1889, %v1889
      %v1900 = vmul.f32 %v1890, %v1890
      %v1901 = vmul.f32 %v1891, %v1891
      %v1902 = vmul.f32 %v1892, %v1892
      %v1903 = vmul.f32 %v1893, %v1893
      %v1904 = vmul.f32 %v1894, %v1894
      %v1905 = vadd.f32 %v1855, %v1895
      %v1906 = vadd.f32 %v1856, %v1896
      %v1907 = vadd.f32 %v1857, %v1897
      %v1908 = vadd.f32 %v1858, %v1898
      %v1909 = vadd.f32 %v1859, %v1899
      %v1910 = vadd.f32 %v1860, %v1900
      %v1911 = vadd.f32 %v1861, %v1901
      %v1912 = vadd.f32 %v1862, %v1902
      %v1913 = vadd.f32 %v1863, %v1903
      %v1914 = vadd.f32 %v1864, %v1904
      %v1915 = vmin.f32 %v1760, %v1764
      %v1916 = vmin.f32 %v1762, %v1766
      %v1917 = vmin.f32 %v1915, %v1768
      %v1918 = vmin.f32 %v1917, %v1916
      %v1919 = vrot.slane %v1918, 4
      %v1920 = vmin.f32 %v1918, %v1919
      %v1921 = vrot.slane %v1920, 2
      %v1922 = vmin.f32 %v1920, %v1921
      %v1923 = vrot.slane %v1922, 1
      %v1924 = vmin.f32 %v1922, %v1923
      %v1925 = vsel %vm766, %v1761, inf
      %v1926 = vsel %vm766, %v1763, inf
      %v1927 = vsel %vm766, %v1765, inf
      %v1928 = vmin.f32 %v1925, %v1927
      %v1929 = vsel %vm766, %v1767, inf
      %v1930 = vmin.f32 %v1926, %v1929
      %v1931 = vsel %vm766, %v1769, inf
      %v1932 = vmin.f32 %v1928, %v1931
      %v1933 = vmin.f32 %v1932, %v1930
      %v1934 = vrot.slane %v1933, 4
      %v1935 = vmin.f32 %v1933, %v1934
      %v1936 = vrot.slane %v1935, 2
      %v1937 = vmin.f32 %v1935, %v1936
      %v1938 = vrot.slane %v1937, 1
      %v1939 = vmin.f32 %v1937, %v1938
      %v1940 = vmin.f32 %v1905, %v1909
      %v1941 = vmin.f32 %v1907, %v1911
      %v1942 = vmin.f32 %v1940, %v1913
      %v1943 = vmin.f32 %v1942, %v1941
      %v1944 = vrot.slane %v1943, 4
      %v1945 = vmin.f32 %v1943, %v1944
      %v1946 = vrot.slane %v1945, 2
      %v1947 = vmin.f32 %v1945, %v1946
      %v1948 = vrot.slane %v1947, 1
      %v1949 = vmin.f32 %v1947, %v1948
      %v1950 = vsel %vm766, %v1906, inf
      %v1951 = vsel %vm766, %v1908, inf
      %v1952 = vsel %vm766, %v1910, inf
      %v1953 = vmin.f32 %v1950, %v1952
      %v1954 = vsel %vm766, %v1912, inf
      %v1955 = vmin.f32 %v1951, %v1954
      %v1956 = vsel %vm766, %v1914, inf
      %v1957 = vmin.f32 %v1953, %v1956
      %v1958 = vmin.f32 %v1957, %v1955
      %v1959 = vrot.slane %v1958, 4
      %v1960 = vmin.f32 %v1958, %v1959
      %v1961 = vrot.slane %v1960, 2
      %v1962 = vmin.f32 %v1960, %v1961
      %v1963 = vrot.slane %v1962, 1
      %v1964 = vmin.f32 %v1962, %v1963
      %v1966 = vlaneseq
      %v1967 = vshrl.u32 %v1966, 7
      %v1968 = vsub.s32 0, %v1967
      %v1969 = vrot.slane %v1622, %v1968
      %v1970 = vlaneseq
      %v1971 = vshrl.u32 %v1970, 7
      %v1972 = vsub.s32 1, %v1971
      %v1973 = vrot.slane %v1622, %v1972
      %v1976 = vmul.f32 %v1924, %v1969
      %v1977 = vmul.f32 %v1939, %v1973
      %v1978 = vadd.f32 %v1607, %v1976
      %v1979 = vadd.f32 %v1608, %v1977
      %v1981 = vlaneseq
      %v1982 = vshrl.u32 %v1981, 7
      %v1983 = vsub.s32 0, %v1982
      %v1984 = vrot.slane %v1624, %v1983
      %v1985 = vlaneseq
      %v1986 = vshrl.u32 %v1985, 7
      %v1987 = vsub.s32 1, %v1986
      %v1988 = vrot.slane %v1624, %v1987
      %v1991 = vmul.f32 %v1949, %v1984
      %v1992 = vmul.f32 %v1964, %v1988
      %v1993 = vadd.f32 %v1978, %v1991
      %v1994 = vadd.f32 %v1979, %v1992
      %s1995 = scalar_lea.vmem %s315, 160
      %v1996 = vld [vmem:[%s1995] sm:$0xff]
      %v1997 = vld [vmem:[%s1995 + $0x8] sm:$0xff]
      %v1998 = vld [vmem:[%s1995 + $0x10] sm:$0xff]
      %v1999 = vld [vmem:[%s1995 + $0x18] sm:$0xff]
      %v2000 = vld [vmem:[%s1995 + $0x20] sm:$0xff]
      %s2001 = scalar_lea.vmem %s320, 160
      %v2002 = vld [vmem:[%s2001] sm:$0xff]
      %v2003 = vld [vmem:[%s2001 + $0x8] sm:$0xff]
      %v2004 = vld [vmem:[%s2001 + $0x10] sm:$0xff]
      %v2005 = vld [vmem:[%s2001 + $0x18] sm:$0xff]
      %v2006 = vld [vmem:[%s2001 + $0x20] sm:$0xff]
      %s2007 = scalar_lea.vmem %s334, 8
      %v2008 = vld [vmem:[%s2007] sm:$0x3]
      %s2009 = scalar_lea.vmem %s338, 8
      %v2010 = vld [vmem:[%s2009] sm:$0x3]
      %2012 = vset.pattern.permute.xlu0 0
      %2013 = vperm.xlu0 %2012, %v1996
      %v2014 = vpop.permute.xlu0 %2013
      %2017 = vset.pattern.permute.xlu0 0
      %2018 = vperm.xlu0 %2017, %v1997
      %v2019 = vpop.permute.xlu0 %2018
      %2022 = vset.pattern.permute.xlu0 0
      %2023 = vperm.xlu0 %2022, %v1998
      %v2024 = vpop.permute.xlu0 %2023
      %2027 = vset.pattern.permute.xlu0 0
      %2028 = vperm.xlu0 %2027, %v1999
      %v2029 = vpop.permute.xlu0 %2028
      %2032 = vset.pattern.permute.xlu0 0
      %2033 = vperm.xlu0 %2032, %v2000
      %v2034 = vpop.permute.xlu0 %2033
      %v2036 = vsub.f32 %v2014, %v395
      %v2037 = vsub.f32 %v2014, %v399
      %v2038 = vsub.f32 %v2019, %v395
      %v2039 = vsub.f32 %v2019, %v399
      %v2040 = vsub.f32 %v2024, %v395
      %v2041 = vsub.f32 %v2024, %v399
      %v2042 = vsub.f32 %v2029, %v395
      %v2043 = vsub.f32 %v2029, %v399
      %v2044 = vsub.f32 %v2034, %v395
      %v2045 = vsub.f32 %v2034, %v399
      %v2046 = vmul.f32 %v2036, %v2036
      %v2047 = vmul.f32 %v2037, %v2037
      %v2048 = vmul.f32 %v2038, %v2038
      %v2049 = vmul.f32 %v2039, %v2039
      %v2050 = vmul.f32 %v2040, %v2040
      %v2051 = vmul.f32 %v2041, %v2041
      %v2052 = vmul.f32 %v2042, %v2042
      %v2053 = vmul.f32 %v2043, %v2043
      %v2054 = vmul.f32 %v2044, %v2044
      %v2055 = vmul.f32 %v2045, %v2045
      %2056 = vset.pattern.permute.xlu0 1
      %2057 = vperm.xlu0 %2056, %v1996
      %v2058 = vpop.permute.xlu0 %2057
      %2060 = vset.pattern.permute.xlu0 1
      %2061 = vperm.xlu0 %2060, %v1997
      %v2062 = vpop.permute.xlu0 %2061
      %2064 = vset.pattern.permute.xlu0 1
      %2065 = vperm.xlu0 %2064, %v1998
      %v2066 = vpop.permute.xlu0 %2065
      %2068 = vset.pattern.permute.xlu0 1
      %2069 = vperm.xlu0 %2068, %v1999
      %v2070 = vpop.permute.xlu0 %2069
      %2072 = vset.pattern.permute.xlu0 1
      %2073 = vperm.xlu0 %2072, %v2000
      %v2074 = vpop.permute.xlu0 %2073
      %v2076 = vsub.f32 %v2058, %v453
      %v2077 = vsub.f32 %v2058, %v457
      %v2078 = vsub.f32 %v2062, %v453
      %v2079 = vsub.f32 %v2062, %v457
      %v2080 = vsub.f32 %v2066, %v453
      %v2081 = vsub.f32 %v2066, %v457
      %v2082 = vsub.f32 %v2070, %v453
      %v2083 = vsub.f32 %v2070, %v457
      %v2084 = vsub.f32 %v2074, %v453
      %v2085 = vsub.f32 %v2074, %v457
      %v2086 = vmul.f32 %v2076, %v2076
      %v2087 = vmul.f32 %v2077, %v2077
      %v2088 = vmul.f32 %v2078, %v2078
      %v2089 = vmul.f32 %v2079, %v2079
      %v2090 = vmul.f32 %v2080, %v2080
      %v2091 = vmul.f32 %v2081, %v2081
      %v2092 = vmul.f32 %v2082, %v2082
      %v2093 = vmul.f32 %v2083, %v2083
      %v2094 = vmul.f32 %v2084, %v2084
      %v2095 = vmul.f32 %v2085, %v2085
      %v2096 = vadd.f32 %v2046, %v2086
      %v2097 = vadd.f32 %v2047, %v2087
      %v2098 = vadd.f32 %v2048, %v2088
      %v2099 = vadd.f32 %v2049, %v2089
      %v2100 = vadd.f32 %v2050, %v2090
      %v2101 = vadd.f32 %v2051, %v2091
      %v2102 = vadd.f32 %v2052, %v2092
      %v2103 = vadd.f32 %v2053, %v2093
      %v2104 = vadd.f32 %v2054, %v2094
      %v2105 = vadd.f32 %v2055, %v2095
      %2106 = vset.pattern.permute.xlu0 2
      %2107 = vperm.xlu0 %2106, %v1996
      %v2108 = vpop.permute.xlu0 %2107
      %2110 = vset.pattern.permute.xlu0 2
      %2111 = vperm.xlu0 %2110, %v1997
      %v2112 = vpop.permute.xlu0 %2111
      %2114 = vset.pattern.permute.xlu0 2
      %2115 = vperm.xlu0 %2114, %v1998
      %v2116 = vpop.permute.xlu0 %2115
      %2118 = vset.pattern.permute.xlu0 2
      %2119 = vperm.xlu0 %2118, %v1999
      %v2120 = vpop.permute.xlu0 %2119
      %2122 = vset.pattern.permute.xlu0 2
      %2123 = vperm.xlu0 %2122, %v2000
      %v2124 = vpop.permute.xlu0 %2123
      %v2126 = vsub.f32 %v2108, %v521
      %v2127 = vsub.f32 %v2108, %v525
      %v2128 = vsub.f32 %v2112, %v521
      %v2129 = vsub.f32 %v2112, %v525
      %v2130 = vsub.f32 %v2116, %v521
      %v2131 = vsub.f32 %v2116, %v525
      %v2132 = vsub.f32 %v2120, %v521
      %v2133 = vsub.f32 %v2120, %v525
      %v2134 = vsub.f32 %v2124, %v521
      %v2135 = vsub.f32 %v2124, %v525
      %v2136 = vmul.f32 %v2126, %v2126
      %v2137 = vmul.f32 %v2127, %v2127
      %v2138 = vmul.f32 %v2128, %v2128
      %v2139 = vmul.f32 %v2129, %v2129
      %v2140 = vmul.f32 %v2130, %v2130
      %v2141 = vmul.f32 %v2131, %v2131
      %v2142 = vmul.f32 %v2132, %v2132
      %v2143 = vmul.f32 %v2133, %v2133
      %v2144 = vmul.f32 %v2134, %v2134
      %v2145 = vmul.f32 %v2135, %v2135
      %v2146 = vadd.f32 %v2096, %v2136
      %v2147 = vadd.f32 %v2097, %v2137
      %v2148 = vadd.f32 %v2098, %v2138
      %v2149 = vadd.f32 %v2099, %v2139
      %v2150 = vadd.f32 %v2100, %v2140
      %v2151 = vadd.f32 %v2101, %v2141
      %v2152 = vadd.f32 %v2102, %v2142
      %v2153 = vadd.f32 %v2103, %v2143
      %v2154 = vadd.f32 %v2104, %v2144
      %v2155 = vadd.f32 %v2105, %v2145
      %2157 = vset.pattern.permute.xlu0 0
      %2158 = vperm.xlu0 %2157, %v2002
      %v2159 = vpop.permute.xlu0 %2158
      %2162 = vset.pattern.permute.xlu0 0
      %2163 = vperm.xlu0 %2162, %v2003
      %v2164 = vpop.permute.xlu0 %2163
      %2167 = vset.pattern.permute.xlu0 0
      %2168 = vperm.xlu0 %2167, %v2004
      %v2169 = vpop.permute.xlu0 %2168
      %2172 = vset.pattern.permute.xlu0 0
      %2173 = vperm.xlu0 %2172, %v2005
      %v2174 = vpop.permute.xlu0 %2173
      %2177 = vset.pattern.permute.xlu0 0
      %2178 = vperm.xlu0 %2177, %v2006
      %v2179 = vpop.permute.xlu0 %2178
      %v2181 = vsub.f32 %v2159, %v595
      %v2182 = vsub.f32 %v2159, %v599
      %v2183 = vsub.f32 %v2164, %v595
      %v2184 = vsub.f32 %v2164, %v599
      %v2185 = vsub.f32 %v2169, %v595
      %v2186 = vsub.f32 %v2169, %v599
      %v2187 = vsub.f32 %v2174, %v595
      %v2188 = vsub.f32 %v2174, %v599
      %v2189 = vsub.f32 %v2179, %v595
      %v2190 = vsub.f32 %v2179, %v599
      %v2191 = vmul.f32 %v2181, %v2181
      %v2192 = vmul.f32 %v2182, %v2182
      %v2193 = vmul.f32 %v2183, %v2183
      %v2194 = vmul.f32 %v2184, %v2184
      %v2195 = vmul.f32 %v2185, %v2185
      %v2196 = vmul.f32 %v2186, %v2186
      %v2197 = vmul.f32 %v2187, %v2187
      %v2198 = vmul.f32 %v2188, %v2188
      %v2199 = vmul.f32 %v2189, %v2189
      %v2200 = vmul.f32 %v2190, %v2190
      %2201 = vset.pattern.permute.xlu0 1
      %2202 = vperm.xlu0 %2201, %v2002
      %v2203 = vpop.permute.xlu0 %2202
      %2205 = vset.pattern.permute.xlu0 1
      %2206 = vperm.xlu0 %2205, %v2003
      %v2207 = vpop.permute.xlu0 %2206
      %2209 = vset.pattern.permute.xlu0 1
      %2210 = vperm.xlu0 %2209, %v2004
      %v2211 = vpop.permute.xlu0 %2210
      %2213 = vset.pattern.permute.xlu0 1
      %2214 = vperm.xlu0 %2213, %v2005
      %v2215 = vpop.permute.xlu0 %2214
      %2217 = vset.pattern.permute.xlu0 1
      %2218 = vperm.xlu0 %2217, %v2006
      %v2219 = vpop.permute.xlu0 %2218
      %v2221 = vsub.f32 %v2203, %v653
      %v2222 = vsub.f32 %v2203, %v657
      %v2223 = vsub.f32 %v2207, %v653
      %v2224 = vsub.f32 %v2207, %v657
      %v2225 = vsub.f32 %v2211, %v653
      %v2226 = vsub.f32 %v2211, %v657
      %v2227 = vsub.f32 %v2215, %v653
      %v2228 = vsub.f32 %v2215, %v657
      %v2229 = vsub.f32 %v2219, %v653
      %v2230 = vsub.f32 %v2219, %v657
      %v2231 = vmul.f32 %v2221, %v2221
      %v2232 = vmul.f32 %v2222, %v2222
      %v2233 = vmul.f32 %v2223, %v2223
      %v2234 = vmul.f32 %v2224, %v2224
      %v2235 = vmul.f32 %v2225, %v2225
      %v2236 = vmul.f32 %v2226, %v2226
      %v2237 = vmul.f32 %v2227, %v2227
      %v2238 = vmul.f32 %v2228, %v2228
      %v2239 = vmul.f32 %v2229, %v2229
      %v2240 = vmul.f32 %v2230, %v2230
      %v2241 = vadd.f32 %v2191, %v2231
      %v2242 = vadd.f32 %v2192, %v2232
      %v2243 = vadd.f32 %v2193, %v2233
      %v2244 = vadd.f32 %v2194, %v2234
      %v2245 = vadd.f32 %v2195, %v2235
      %v2246 = vadd.f32 %v2196, %v2236
      %v2247 = vadd.f32 %v2197, %v2237
      %v2248 = vadd.f32 %v2198, %v2238
      %v2249 = vadd.f32 %v2199, %v2239
      %v2250 = vadd.f32 %v2200, %v2240
      %2251 = vset.pattern.permute.xlu0 2
      %2252 = vperm.xlu0 %2251, %v2002
      %v2253 = vpop.permute.xlu0 %2252
      %2255 = vset.pattern.permute.xlu0 2
      %2256 = vperm.xlu0 %2255, %v2003
      %v2257 = vpop.permute.xlu0 %2256
      %2259 = vset.pattern.permute.xlu0 2
      %2260 = vperm.xlu0 %2259, %v2004
      %v2261 = vpop.permute.xlu0 %2260
      %2263 = vset.pattern.permute.xlu0 2
      %2264 = vperm.xlu0 %2263, %v2005
      %v2265 = vpop.permute.xlu0 %2264
      %2267 = vset.pattern.permute.xlu0 2
      %2268 = vperm.xlu0 %2267, %v2006
      %v2269 = vpop.permute.xlu0 %2268
      %v2271 = vsub.f32 %v2253, %v721
      %v2272 = vsub.f32 %v2253, %v725
      %v2273 = vsub.f32 %v2257, %v721
      %v2274 = vsub.f32 %v2257, %v725
      %v2275 = vsub.f32 %v2261, %v721
      %v2276 = vsub.f32 %v2261, %v725
      %v2277 = vsub.f32 %v2265, %v721
      %v2278 = vsub.f32 %v2265, %v725
      %v2279 = vsub.f32 %v2269, %v721
      %v2280 = vsub.f32 %v2269, %v725
      %v2281 = vmul.f32 %v2271, %v2271
      %v2282 = vmul.f32 %v2272, %v2272
      %v2283 = vmul.f32 %v2273, %v2273
      %v2284 = vmul.f32 %v2274, %v2274
      %v2285 = vmul.f32 %v2275, %v2275
      %v2286 = vmul.f32 %v2276, %v2276
      %v2287 = vmul.f32 %v2277, %v2277
      %v2288 = vmul.f32 %v2278, %v2278
      %v2289 = vmul.f32 %v2279, %v2279
      %v2290 = vmul.f32 %v2280, %v2280
      %v2291 = vadd.f32 %v2241, %v2281
      %v2292 = vadd.f32 %v2242, %v2282
      %v2293 = vadd.f32 %v2243, %v2283
      %v2294 = vadd.f32 %v2244, %v2284
      %v2295 = vadd.f32 %v2245, %v2285
      %v2296 = vadd.f32 %v2246, %v2286
      %v2297 = vadd.f32 %v2247, %v2287
      %v2298 = vadd.f32 %v2248, %v2288
      %v2299 = vadd.f32 %v2249, %v2289
      %v2300 = vadd.f32 %v2250, %v2290
      %v2301 = vmin.f32 %v2146, %v2150
      %v2302 = vmin.f32 %v2148, %v2152
      %v2303 = vmin.f32 %v2301, %v2154
      %v2304 = vmin.f32 %v2303, %v2302
      %v2305 = vrot.slane %v2304, 4
      %v2306 = vmin.f32 %v2304, %v2305
      %v2307 = vrot.slane %v2306, 2
      %v2308 = vmin.f32 %v2306, %v2307
      %v2309 = vrot.slane %v2308, 1
      %v2310 = vmin.f32 %v2308, %v2309
      %v2311 = vsel %vm766, %v2147, inf
      %v2312 = vsel %vm766, %v2149, inf
      %v2313 = vsel %vm766, %v2151, inf
      %v2314 = vmin.f32 %v2311, %v2313
      %v2315 = vsel %vm766, %v2153, inf
      %v2316 = vmin.f32 %v2312, %v2315
      %v2317 = vsel %vm766, %v2155, inf
      %v2318 = vmin.f32 %v2314, %v2317
      %v2319 = vmin.f32 %v2318, %v2316
      %v2320 = vrot.slane %v2319, 4
      %v2321 = vmin.f32 %v2319, %v2320
      %v2322 = vrot.slane %v2321, 2
      %v2323 = vmin.f32 %v2321, %v2322
      %v2324 = vrot.slane %v2323, 1
      %v2325 = vmin.f32 %v2323, %v2324
      %v2326 = vmin.f32 %v2291, %v2295
      %v2327 = vmin.f32 %v2293, %v2297
      %v2328 = vmin.f32 %v2326, %v2299
      %v2329 = vmin.f32 %v2328, %v2327
      %v2330 = vrot.slane %v2329, 4
      %v2331 = vmin.f32 %v2329, %v2330
      %v2332 = vrot.slane %v2331, 2
      %v2333 = vmin.f32 %v2331, %v2332
      %v2334 = vrot.slane %v2333, 1
      %v2335 = vmin.f32 %v2333, %v2334
      %v2336 = vsel %vm766, %v2292, inf
      %v2337 = vsel %vm766, %v2294, inf
      %v2338 = vsel %vm766, %v2296, inf
      %v2339 = vmin.f32 %v2336, %v2338
      %v2340 = vsel %vm766, %v2298, inf
      %v2341 = vmin.f32 %v2337, %v2340
      %v2342 = vsel %vm766, %v2300, inf
      %v2343 = vmin.f32 %v2339, %v2342
      %v2344 = vmin.f32 %v2343, %v2341
      %v2345 = vrot.slane %v2344, 4
      %v2346 = vmin.f32 %v2344, %v2345
      %v2347 = vrot.slane %v2346, 2
      %v2348 = vmin.f32 %v2346, %v2347
      %v2349 = vrot.slane %v2348, 1
      %v2350 = vmin.f32 %v2348, %v2349
      %v2352 = vlaneseq
      %v2353 = vshrl.u32 %v2352, 7
      %v2354 = vsub.s32 0, %v2353
      %v2355 = vrot.slane %v2008, %v2354
      %v2356 = vlaneseq
      %v2357 = vshrl.u32 %v2356, 7
      %v2358 = vsub.s32 1, %v2357
      %v2359 = vrot.slane %v2008, %v2358
      %v2362 = vmul.f32 %v2310, %v2355
      %v2363 = vmul.f32 %v2325, %v2359
      %v2364 = vadd.f32 %v1993, %v2362
      %v2365 = vadd.f32 %v1994, %v2363
      %v2367 = vlaneseq
      %v2368 = vshrl.u32 %v2367, 7
      %v2369 = vsub.s32 0, %v2368
      %v2370 = vrot.slane %v2010, %v2369
      %v2371 = vlaneseq
      %v2372 = vshrl.u32 %v2371, 7
      %v2373 = vsub.s32 1, %v2372
      %v2374 = vrot.slane %v2010, %v2373
      %v2377 = vmul.f32 %v2335, %v2370
      %v2378 = vmul.f32 %v2350, %v2374
      %v2379 = vadd.f32 %v2364, %v2377
      %v2380 = vadd.f32 %v2365, %v2378
      %s2381 = scalar_lea.vmem %s315, 200
      %v2382 = vld [vmem:[%s2381] sm:$0xff]
      %v2383 = vld [vmem:[%s2381 + $0x8] sm:$0xff]
      %v2384 = vld [vmem:[%s2381 + $0x10] sm:$0xff]
      %v2385 = vld [vmem:[%s2381 + $0x18] sm:$0xff]
      %v2386 = vld [vmem:[%s2381 + $0x20] sm:$0xff]
      %s2387 = scalar_lea.vmem %s320, 200
      %v2388 = vld [vmem:[%s2387] sm:$0xff]
      %v2389 = vld [vmem:[%s2387 + $0x8] sm:$0xff]
      %v2390 = vld [vmem:[%s2387 + $0x10] sm:$0xff]
      %v2391 = vld [vmem:[%s2387 + $0x18] sm:$0xff]
      %v2392 = vld [vmem:[%s2387 + $0x20] sm:$0xff]
      %s2393 = scalar_lea.vmem %s334, 10
      %v2394 = vld [vmem:[%s2393] sm:$0x3]
      %s2395 = scalar_lea.vmem %s338, 10
      %v2396 = vld [vmem:[%s2395] sm:$0x3]
      %2398 = vset.pattern.permute.xlu0 0
      %2399 = vperm.xlu0 %2398, %v2382
      %v2400 = vpop.permute.xlu0 %2399
      %2403 = vset.pattern.permute.xlu0 0
      %2404 = vperm.xlu0 %2403, %v2383
      %v2405 = vpop.permute.xlu0 %2404
      %2408 = vset.pattern.permute.xlu0 0
      %2409 = vperm.xlu0 %2408, %v2384
      %v2410 = vpop.permute.xlu0 %2409
      %2413 = vset.pattern.permute.xlu0 0
      %2414 = vperm.xlu0 %2413, %v2385
      %v2415 = vpop.permute.xlu0 %2414
      %2418 = vset.pattern.permute.xlu0 0
      %2419 = vperm.xlu0 %2418, %v2386
      %v2420 = vpop.permute.xlu0 %2419
      %v2422 = vsub.f32 %v2400, %v395
      %v2423 = vsub.f32 %v2400, %v399
      %v2424 = vsub.f32 %v2405, %v395
      %v2425 = vsub.f32 %v2405, %v399
      %v2426 = vsub.f32 %v2410, %v395
      %v2427 = vsub.f32 %v2410, %v399
      %v2428 = vsub.f32 %v2415, %v395
      %v2429 = vsub.f32 %v2415, %v399
      %v2430 = vsub.f32 %v2420, %v395
      %v2431 = vsub.f32 %v2420, %v399
      %v2432 = vmul.f32 %v2422, %v2422
      %v2433 = vmul.f32 %v2423, %v2423
      %v2434 = vmul.f32 %v2424, %v2424
      %v2435 = vmul.f32 %v2425, %v2425
      %v2436 = vmul.f32 %v2426, %v2426
      %v2437 = vmul.f32 %v2427, %v2427
      %v2438 = vmul.f32 %v2428, %v2428
      %v2439 = vmul.f32 %v2429, %v2429
      %v2440 = vmul.f32 %v2430, %v2430
      %v2441 = vmul.f32 %v2431, %v2431
      %2442 = vset.pattern.permute.xlu0 1
      %2443 = vperm.xlu0 %2442, %v2382
      %v2444 = vpop.permute.xlu0 %2443
      %2446 = vset.pattern.permute.xlu0 1
      %2447 = vperm.xlu0 %2446, %v2383
      %v2448 = vpop.permute.xlu0 %2447
      %2450 = vset.pattern.permute.xlu0 1
      %2451 = vperm.xlu0 %2450, %v2384
      %v2452 = vpop.permute.xlu0 %2451
      %2454 = vset.pattern.permute.xlu0 1
      %2455 = vperm.xlu0 %2454, %v2385
      %v2456 = vpop.permute.xlu0 %2455
      %2458 = vset.pattern.permute.xlu0 1
      %2459 = vperm.xlu0 %2458, %v2386
      %v2460 = vpop.permute.xlu0 %2459
      %v2462 = vsub.f32 %v2444, %v453
      %v2463 = vsub.f32 %v2444, %v457
      %v2464 = vsub.f32 %v2448, %v453
      %v2465 = vsub.f32 %v2448, %v457
      %v2466 = vsub.f32 %v2452, %v453
      %v2467 = vsub.f32 %v2452, %v457
      %v2468 = vsub.f32 %v2456, %v453
      %v2469 = vsub.f32 %v2456, %v457
      %v2470 = vsub.f32 %v2460, %v453
      %v2471 = vsub.f32 %v2460, %v457
      %v2472 = vmul.f32 %v2462, %v2462
      %v2473 = vmul.f32 %v2463, %v2463
      %v2474 = vmul.f32 %v2464, %v2464
      %v2475 = vmul.f32 %v2465, %v2465
      %v2476 = vmul.f32 %v2466, %v2466
      %v2477 = vmul.f32 %v2467, %v2467
      %v2478 = vmul.f32 %v2468, %v2468
      %v2479 = vmul.f32 %v2469, %v2469
      %v2480 = vmul.f32 %v2470, %v2470
      %v2481 = vmul.f32 %v2471, %v2471
      %v2482 = vadd.f32 %v2432, %v2472
      %v2483 = vadd.f32 %v2433, %v2473
      %v2484 = vadd.f32 %v2434, %v2474
      %v2485 = vadd.f32 %v2435, %v2475
      %v2486 = vadd.f32 %v2436, %v2476
      %v2487 = vadd.f32 %v2437, %v2477
      %v2488 = vadd.f32 %v2438, %v2478
      %v2489 = vadd.f32 %v2439, %v2479
      %v2490 = vadd.f32 %v2440, %v2480
      %v2491 = vadd.f32 %v2441, %v2481
      %2492 = vset.pattern.permute.xlu0 2
      %2493 = vperm.xlu0 %2492, %v2382
      %v2494 = vpop.permute.xlu0 %2493
      %2496 = vset.pattern.permute.xlu0 2
      %2497 = vperm.xlu0 %2496, %v2383
      %v2498 = vpop.permute.xlu0 %2497
      %2500 = vset.pattern.permute.xlu0 2
      %2501 = vperm.xlu0 %2500, %v2384
      %v2502 = vpop.permute.xlu0 %2501
      %2504 = vset.pattern.permute.xlu0 2
      %2505 = vperm.xlu0 %2504, %v2385
      %v2506 = vpop.permute.xlu0 %2505
      %2508 = vset.pattern.permute.xlu0 2
      %2509 = vperm.xlu0 %2508, %v2386
      %v2510 = vpop.permute.xlu0 %2509
      %v2512 = vsub.f32 %v2494, %v521
      %v2513 = vsub.f32 %v2494, %v525
      %v2514 = vsub.f32 %v2498, %v521
      %v2515 = vsub.f32 %v2498, %v525
      %v2516 = vsub.f32 %v2502, %v521
      %v2517 = vsub.f32 %v2502, %v525
      %v2518 = vsub.f32 %v2506, %v521
      %v2519 = vsub.f32 %v2506, %v525
      %v2520 = vsub.f32 %v2510, %v521
      %v2521 = vsub.f32 %v2510, %v525
      %v2522 = vmul.f32 %v2512, %v2512
      %v2523 = vmul.f32 %v2513, %v2513
      %v2524 = vmul.f32 %v2514, %v2514
      %v2525 = vmul.f32 %v2515, %v2515
      %v2526 = vmul.f32 %v2516, %v2516
      %v2527 = vmul.f32 %v2517, %v2517
      %v2528 = vmul.f32 %v2518, %v2518
      %v2529 = vmul.f32 %v2519, %v2519
      %v2530 = vmul.f32 %v2520, %v2520
      %v2531 = vmul.f32 %v2521, %v2521
      %v2532 = vadd.f32 %v2482, %v2522
      %v2533 = vadd.f32 %v2483, %v2523
      %v2534 = vadd.f32 %v2484, %v2524
      %v2535 = vadd.f32 %v2485, %v2525
      %v2536 = vadd.f32 %v2486, %v2526
      %v2537 = vadd.f32 %v2487, %v2527
      %v2538 = vadd.f32 %v2488, %v2528
      %v2539 = vadd.f32 %v2489, %v2529
      %v2540 = vadd.f32 %v2490, %v2530
      %v2541 = vadd.f32 %v2491, %v2531
      %2543 = vset.pattern.permute.xlu0 0
      %2544 = vperm.xlu0 %2543, %v2388
      %v2545 = vpop.permute.xlu0 %2544
      %2548 = vset.pattern.permute.xlu0 0
      %2549 = vperm.xlu0 %2548, %v2389
      %v2550 = vpop.permute.xlu0 %2549
      %2553 = vset.pattern.permute.xlu0 0
      %2554 = vperm.xlu0 %2553, %v2390
      %v2555 = vpop.permute.xlu0 %2554
      %2558 = vset.pattern.permute.xlu0 0
      %2559 = vperm.xlu0 %2558, %v2391
      %v2560 = vpop.permute.xlu0 %2559
      %2563 = vset.pattern.permute.xlu0 0
      %2564 = vperm.xlu0 %2563, %v2392
      %v2565 = vpop.permute.xlu0 %2564
      %v2567 = vsub.f32 %v2545, %v595
      %v2568 = vsub.f32 %v2545, %v599
      %v2569 = vsub.f32 %v2550, %v595
      %v2570 = vsub.f32 %v2550, %v599
      %v2571 = vsub.f32 %v2555, %v595
      %v2572 = vsub.f32 %v2555, %v599
      %v2573 = vsub.f32 %v2560, %v595
      %v2574 = vsub.f32 %v2560, %v599
      %v2575 = vsub.f32 %v2565, %v595
      %v2576 = vsub.f32 %v2565, %v599
      %v2577 = vmul.f32 %v2567, %v2567
      %v2578 = vmul.f32 %v2568, %v2568
      %v2579 = vmul.f32 %v2569, %v2569
      %v2580 = vmul.f32 %v2570, %v2570
      %v2581 = vmul.f32 %v2571, %v2571
      %v2582 = vmul.f32 %v2572, %v2572
      %v2583 = vmul.f32 %v2573, %v2573
      %v2584 = vmul.f32 %v2574, %v2574
      %v2585 = vmul.f32 %v2575, %v2575
      %v2586 = vmul.f32 %v2576, %v2576
      %2587 = vset.pattern.permute.xlu0 1
      %2588 = vperm.xlu0 %2587, %v2388
      %v2589 = vpop.permute.xlu0 %2588
      %2591 = vset.pattern.permute.xlu0 1
      %2592 = vperm.xlu0 %2591, %v2389
      %v2593 = vpop.permute.xlu0 %2592
      %2595 = vset.pattern.permute.xlu0 1
      %2596 = vperm.xlu0 %2595, %v2390
      %v2597 = vpop.permute.xlu0 %2596
      %2599 = vset.pattern.permute.xlu0 1
      %2600 = vperm.xlu0 %2599, %v2391
      %v2601 = vpop.permute.xlu0 %2600
      %2603 = vset.pattern.permute.xlu0 1
      %2604 = vperm.xlu0 %2603, %v2392
      %v2605 = vpop.permute.xlu0 %2604
      %v2607 = vsub.f32 %v2589, %v653
      %v2608 = vsub.f32 %v2589, %v657
      %v2609 = vsub.f32 %v2593, %v653
      %v2610 = vsub.f32 %v2593, %v657
      %v2611 = vsub.f32 %v2597, %v653
      %v2612 = vsub.f32 %v2597, %v657
      %v2613 = vsub.f32 %v2601, %v653
      %v2614 = vsub.f32 %v2601, %v657
      %v2615 = vsub.f32 %v2605, %v653
      %v2616 = vsub.f32 %v2605, %v657
      %v2617 = vmul.f32 %v2607, %v2607
      %v2618 = vmul.f32 %v2608, %v2608
      %v2619 = vmul.f32 %v2609, %v2609
      %v2620 = vmul.f32 %v2610, %v2610
      %v2621 = vmul.f32 %v2611, %v2611
      %v2622 = vmul.f32 %v2612, %v2612
      %v2623 = vmul.f32 %v2613, %v2613
      %v2624 = vmul.f32 %v2614, %v2614
      %v2625 = vmul.f32 %v2615, %v2615
      %v2626 = vmul.f32 %v2616, %v2616
      %v2627 = vadd.f32 %v2577, %v2617
      %v2628 = vadd.f32 %v2578, %v2618
      %v2629 = vadd.f32 %v2579, %v2619
      %v2630 = vadd.f32 %v2580, %v2620
      %v2631 = vadd.f32 %v2581, %v2621
      %v2632 = vadd.f32 %v2582, %v2622
      %v2633 = vadd.f32 %v2583, %v2623
      %v2634 = vadd.f32 %v2584, %v2624
      %v2635 = vadd.f32 %v2585, %v2625
      %v2636 = vadd.f32 %v2586, %v2626
      %2637 = vset.pattern.permute.xlu0 2
      %2638 = vperm.xlu0 %2637, %v2388
      %v2639 = vpop.permute.xlu0 %2638
      %2641 = vset.pattern.permute.xlu0 2
      %2642 = vperm.xlu0 %2641, %v2389
      %v2643 = vpop.permute.xlu0 %2642
      %2645 = vset.pattern.permute.xlu0 2
      %2646 = vperm.xlu0 %2645, %v2390
      %v2647 = vpop.permute.xlu0 %2646
      %2649 = vset.pattern.permute.xlu0 2
      %2650 = vperm.xlu0 %2649, %v2391
      %v2651 = vpop.permute.xlu0 %2650
      %2653 = vset.pattern.permute.xlu0 2
      %2654 = vperm.xlu0 %2653, %v2392
      %v2655 = vpop.permute.xlu0 %2654
      %v2657 = vsub.f32 %v2639, %v721
      %v2658 = vsub.f32 %v2639, %v725
      %v2659 = vsub.f32 %v2643, %v721
      %v2660 = vsub.f32 %v2643, %v725
      %v2661 = vsub.f32 %v2647, %v721
      %v2662 = vsub.f32 %v2647, %v725
      %v2663 = vsub.f32 %v2651, %v721
      %v2664 = vsub.f32 %v2651, %v725
      %v2665 = vsub.f32 %v2655, %v721
      %v2666 = vsub.f32 %v2655, %v725
      %v2667 = vmul.f32 %v2657, %v2657
      %v2668 = vmul.f32 %v2658, %v2658
      %v2669 = vmul.f32 %v2659, %v2659
      %v2670 = vmul.f32 %v2660, %v2660
      %v2671 = vmul.f32 %v2661, %v2661
      %v2672 = vmul.f32 %v2662, %v2662
      %v2673 = vmul.f32 %v2663, %v2663
      %v2674 = vmul.f32 %v2664, %v2664
      %v2675 = vmul.f32 %v2665, %v2665
      %v2676 = vmul.f32 %v2666, %v2666
      %v2677 = vadd.f32 %v2627, %v2667
      %v2678 = vadd.f32 %v2628, %v2668
      %v2679 = vadd.f32 %v2629, %v2669
      %v2680 = vadd.f32 %v2630, %v2670
      %v2681 = vadd.f32 %v2631, %v2671
      %v2682 = vadd.f32 %v2632, %v2672
      %v2683 = vadd.f32 %v2633, %v2673
      %v2684 = vadd.f32 %v2634, %v2674
      %v2685 = vadd.f32 %v2635, %v2675
      %v2686 = vadd.f32 %v2636, %v2676
      %v2687 = vmin.f32 %v2532, %v2536
      %v2688 = vmin.f32 %v2534, %v2538
      %v2689 = vmin.f32 %v2687, %v2540
      %v2690 = vmin.f32 %v2689, %v2688
      %v2691 = vrot.slane %v2690, 4
      %v2692 = vmin.f32 %v2690, %v2691
      %v2693 = vrot.slane %v2692, 2
      %v2694 = vmin.f32 %v2692, %v2693
      %v2695 = vrot.slane %v2694, 1
      %v2696 = vmin.f32 %v2694, %v2695
      %v2697 = vsel %vm766, %v2533, inf
      %v2698 = vsel %vm766, %v2535, inf
      %v2699 = vsel %vm766, %v2537, inf
      %v2700 = vmin.f32 %v2697, %v2699
      %v2701 = vsel %vm766, %v2539, inf
      %v2702 = vmin.f32 %v2698, %v2701
      %v2703 = vsel %vm766, %v2541, inf
      %v2704 = vmin.f32 %v2700, %v2703
      %v2705 = vmin.f32 %v2704, %v2702
      %v2706 = vrot.slane %v2705, 4
      %v2707 = vmin.f32 %v2705, %v2706
      %v2708 = vrot.slane %v2707, 2
      %v2709 = vmin.f32 %v2707, %v2708
      %v2710 = vrot.slane %v2709, 1
      %v2711 = vmin.f32 %v2709, %v2710
      %v2712 = vmin.f32 %v2677, %v2681
      %v2713 = vmin.f32 %v2679, %v2683
      %v2714 = vmin.f32 %v2712, %v2685
      %v2715 = vmin.f32 %v2714, %v2713
      %v2716 = vrot.slane %v2715, 4
      %v2717 = vmin.f32 %v2715, %v2716
      %v2718 = vrot.slane %v2717, 2
      %v2719 = vmin.f32 %v2717, %v2718
      %v2720 = vrot.slane %v2719, 1
      %v2721 = vmin.f32 %v2719, %v2720
      %v2722 = vsel %vm766, %v2678, inf
      %v2723 = vsel %vm766, %v2680, inf
      %v2724 = vsel %vm766, %v2682, inf
      %v2725 = vmin.f32 %v2722, %v2724
      %v2726 = vsel %vm766, %v2684, inf
      %v2727 = vmin.f32 %v2723, %v2726
      %v2728 = vsel %vm766, %v2686, inf
      %v2729 = vmin.f32 %v2725, %v2728
      %v2730 = vmin.f32 %v2729, %v2727
      %v2731 = vrot.slane %v2730, 4
      %v2732 = vmin.f32 %v2730, %v2731
      %v2733 = vrot.slane %v2732, 2
      %v2734 = vmin.f32 %v2732, %v2733
      %v2735 = vrot.slane %v2734, 1
      %v2736 = vmin.f32 %v2734, %v2735
      %v2738 = vlaneseq
      %v2739 = vshrl.u32 %v2738, 7
      %v2740 = vsub.s32 0, %v2739
      %v2741 = vrot.slane %v2394, %v2740
      %v2742 = vlaneseq
      %v2743 = vshrl.u32 %v2742, 7
      %v2744 = vsub.s32 1, %v2743
      %v2745 = vrot.slane %v2394, %v2744
      %v2748 = vmul.f32 %v2696, %v2741
      %v2749 = vmul.f32 %v2711, %v2745
      %v2750 = vadd.f32 %v2379, %v2748
      %v2751 = vadd.f32 %v2380, %v2749
      %v2753 = vlaneseq
      %v2754 = vshrl.u32 %v2753, 7
      %v2755 = vsub.s32 0, %v2754
      %v2756 = vrot.slane %v2396, %v2755
      %v2757 = vlaneseq
      %v2758 = vshrl.u32 %v2757, 7
      %v2759 = vsub.s32 1, %v2758
      %v2760 = vrot.slane %v2396, %v2759
      %v2763 = vmul.f32 %v2721, %v2756
      %v2764 = vmul.f32 %v2736, %v2760
      %v2765 = vadd.f32 %v2750, %v2763
      %v2766 = vadd.f32 %v2751, %v2764
      %vm2767 = vcmask 1040384
      %v2768 = vsel %vm2767, %v2765, 0.0
      %vm2769 = vcmask 909312
      %v2770 = vsel %vm2769, %v2766, 0.0
      %v2771 = vadd.f32 %v2768, %v2770
      %2772 = vadd.xlane.f32.xlu0 %v2771
      %v2773 = vpop.xlane.xlu0 %2772
      %v2774 = vrot.slane %v2773, 4
      %v2775 = vadd.f32 %v2773, %v2774
      %v2776 = vrot.slane %v2775, 2
      %v2777 = vadd.f32 %v2775, %v2776
      %v2778 = vrot.slane %v2777, 1
      %v2779 = vadd.f32 %v2777, %v2778
      %s2780 = vtos %v2779
      %s2781 = smul.f32 %s2780, 0.025
      %v2782 = vstv %s2781
      %v2783 = vadd.f32 %v2782, 0.0
      %vm2784 = vcmask 0
      %2785 = vst.msk [vmem:[%s341] sm:$0x1] %vm2784, %v2783
      %p2786 = scmp.lt.s32.totalorder %s17, 1
      %s2787 = scalar_select %p2786, %s17, 1
      %s2788 = scalar_lea.vmem %s6, %s2787
      // Predicated region
      $region45: #{tpu_custom_call.1} parent=43 // pred_check
        %p2789 = pneg %p191
      $region46: #{tpu_custom_call.1} parent=43 // pred_check_branch
        %2791 = sbr.rel (%p2789) target = $region48
      $region47: #{tpu_custom_call.1} parent=43 // pred_region
        _
      $region48: #{tpu_custom_call.1} parent=43 // pred_fallthru
        _
    $region44: #{tpu_custom_call.1} parent=5 // pred_fallthru
      _
    %p2792 = scmp.le.s32.totalorder 2, %s12
    // Predicated region
    $region49: #{tpu_custom_call.1} parent=5 // pred_check
      %p2793 = pneg %p2792
    $region50: #{tpu_custom_call.1} parent=5 // pred_check_branch
      %2795 = sbr.rel (%p2793) target = $region52
    $region51: #{tpu_custom_call.1} parent=5 // pred_region
      %s2796 = ssub.s32 %s12, 2
      // Predicated region
      $region53: #{tpu_custom_call.1} parent=51 // pred_check
        %p2797 = pneg %p197
      $region54: #{tpu_custom_call.1} parent=51 // pred_check_branch
        %2799 = sbr.rel (%p2797) target = $region56
      $region55: #{tpu_custom_call.1} parent=51 // pred_region
        %p2800 = scmp.lt.s32.totalorder %s18, 1
        %s2801 = scalar_select %p2800, %s18, 1
        %s2802 = scalar_lea.vmem %s6, %s2801
      $region56: #{tpu_custom_call.1} parent=51 // pred_fallthru
        _
    $region52: #{tpu_custom_call.1} parent=5 // pred_fallthru
      _
  $region6: #{tpu_custom_call.1} parent=0 // loop_footer
    %s16 = sadd.s32 1, %s12
  $region7: #{tpu_custom_call.1} parent=0 // loop_footer_branch
    %11 = sbr.rel target = $region3
  $region8: #{tpu_custom_call.1} parent=0 // loop_exit
    _

</llo_original>
